<compile_context>
chip_gen: v7x
topology: tpu7x:2x2x1
jax: 0.10.0
libtpu: 0.0.40
codegen_flags: <defaults>
</compile_context>

<pallas_src>
import jax
import jax.numpy as jnp
import numpy as np
from jax import lax
from jax.experimental import pallas as pl
from jax.experimental.pallas import tpu as pltpu


# ----------------------------------------------------------------------------
# Fused Pallas kernel: all LSTM layers + final Linear in one call
# ----------------------------------------------------------------------------
def _make_fused_kernel(num_layers, T, Bp, H):
    G = 4 * H

    def kernel(*refs):
        if num_layers > 1:
            (x_ref, wih0_ref, b0_ref, wihr_ref, br_ref, whh_ref,
             linw_ref, linb_ref, y_ref, pg_ref) = refs
        else:
            (x_ref, wih0_ref, b0_ref, whh_ref,
             linw_ref, linb_ref, y_ref, pg_ref) = refs
            wihr_ref = br_ref = None

        hseq = None                      # (T*Bp, H) activations of prev layer
        h = jnp.zeros((Bp, H), jnp.float32)

        for layer in range(num_layers):
            # --- batched input projection for ALL time steps (one MXU matmul)
            if layer == 0:
                pg_ref[...] = (jnp.dot(x_ref[...], wih0_ref[...],
                                       preferred_element_type=jnp.float32)
                               + b0_ref[...])
            else:
                pg_ref[...] = (jnp.dot(hseq, wihr_ref[layer - 1],
                                       preferred_element_type=jnp.float32)
                               + br_ref[layer - 1])

            w_hh = whh_ref[layer]                    # (H, 4H), VMEM resident
            is_last = layer == num_layers - 1

            # --- serial recurrence; h/c live in vregs, loop unrolled (static T)
            h = jnp.zeros((Bp, H), jnp.float32)
            c = jnp.zeros((Bp, H), jnp.float32)
            hs = []
            for t in range(T):
                # Bp is a sublane multiple -> aligned, unmasked tile access.
                pre = pg_ref[t * Bp:(t + 1) * Bp, :]          # (Bp, 4H)
                gates = pre + jnp.dot(h, w_hh,
                                      preferred_element_type=jnp.float32)
                # Gate layout is [i, f, o, g]: sigmoid on 3H lanes, tanh on H.
                sg = jax.nn.sigmoid(gates[:, 0:3 * H])        # EUP: 3H lanes
                g_g = jnp.tanh(gates[:, 3 * H:4 * H])         # EUP:  H lanes
                i_g = sg[:, 0 * H:1 * H]
                f_g = sg[:, 1 * H:2 * H]
                o_g = sg[:, 2 * H:3 * H]
                c = f_g * c + i_g * g_g
                h = o_g * jnp.tanh(c)
                if not is_last:
                    hs.append(h)          # stays in vregs; no per-step store

            if not is_last:
                # Bulk assembly of the layer's hidden sequence, off the
                # recurrence critical path; fed straight into the next layer's
                # batched projection (never round-trips through VMEM scratch).
                hseq = jnp.concatenate(hs, axis=0)            # (T*Bp, H)

        # --- fused final Linear on the last hidden state of the last layer
        y_ref[...] = (jnp.dot(h, linw_ref[...],
                              preferred_element_type=jnp.float32)
                      + linb_ref[...])

    return kernel


# ----------------------------------------------------------------------------
# Parameter packing: PyTorch layout -> kernel layout
#   * gate columns reordered [i,f,g,o] -> [i,f,o,g]
#   * per-layer stacks for layers > 0
# ----------------------------------------------------------------------------
def pack_params(params):
    def reorder(w):                       # last axis is 4H in [i, f, g, o]
        Hh = w.shape[-1] // 4
        return jnp.concatenate(
            [w[..., 0 * Hh:1 * Hh],       # i
             w[..., 1 * Hh:2 * Hh],       # f
             w[..., 3 * Hh:4 * Hh],       # o
             w[..., 2 * Hh:3 * Hh]],      # g
            axis=-1)

    lstm = params["lstm"]
    packed = {
        "wih0": reorder(lstm[0][0]),                                   # (D, 4H)
        "b0":   reorder(lstm[0][2]),                                   # (1, 4H)
        "whh":  jnp.stack([reorder(w_hh) for (_, w_hh, _) in lstm], 0),  # (L,H,4H)
        "lin_w": params["lin_w"],                                      # (H, O)
        "lin_b": params["lin_b"],                                      # (1, O)
    }
    if len(lstm) > 1:
        packed["wihr"] = jnp.stack([reorder(w) for (w, _, _) in lstm[1:]], 0)
        packed["br"] = jnp.stack([reorder(b) for (_, _, b) in lstm[1:]], 0)
    return packed


# ----------------------------------------------------------------------------
# Wrapper
# ----------------------------------------------------------------------------
@jax.jit
def simple_lstm_forward(x_btd, packed):
    """x_btd: (B, T, input_size), batch_first like PyTorch.  Returns (B, output)."""
    B, T, D = x_btd.shape
    whh = packed["whh"]
    L, H, G = whh.shape
    O = packed["lin_w"].shape[1]

    # Pad batch to a sublane multiple so per-step slices are tile-aligned.
    Bp = ((B + 7) // 8) * 8
    x_tm = jnp.transpose(x_btd, (1, 0, 2))                 # (T, B, D)
    if Bp != B:
        x_tm = jnp.pad(x_tm, ((0, 0), (0, Bp - B), (0, 0)))
    x2d = x_tm.reshape(T * Bp, D)                          # rows [t*Bp:(t+1)*Bp] = step t

    inputs = [x2d, packed["wih0"], packed["b0"]]
    in_specs = [
        pl.BlockSpec((T * Bp, D), lambda i: (0, 0)),
        pl.BlockSpec((D, G), lambda i: (0, 0)),
        pl.BlockSpec((1, G), lambda i: (0, 0)),
    ]
    if L > 1:
        inputs += [packed["wihr"], packed["br"]]
        in_specs += [
            pl.BlockSpec((L - 1, H, G), lambda i: (0, 0, 0)),
            pl.BlockSpec((L - 1, 1, G), lambda i: (0, 0, 0)),
        ]
    inputs += [whh, packed["lin_w"], packed["lin_b"]]
    in_specs += [
        pl.BlockSpec((L, H, G), lambda i: (0, 0, 0)),
        pl.BlockSpec((H, O), lambda i: (0, 0)),
        pl.BlockSpec((1, O), lambda i: (0, 0)),
    ]

    # Explicit VMEM budget: inputs (x2 double-buffer headroom) + output + scratch.
    f32 = 4
    est = f32 * (2 * (T * Bp * D + D * G + G
                      + max(L - 1, 0) * (H * G + G)
                      + L * H * G + H * O + O + Bp * O)
                 + T * Bp * G)
    vmem_limit = int(min(max(2 * est, 16 << 20), 100 << 20))

    kernel = _make_fused_kernel(L, T, Bp, H)
    y = pl.pallas_call(
        kernel,
        out_shape=jax.ShapeDtypeStruct((Bp, O), jnp.float32),
        grid_spec=pltpu.PrefetchScalarGridSpec(
            num_scalar_prefetch=0,
            grid=(1,),
            in_specs=in_specs,
            out_specs=pl.BlockSpec((Bp, O), lambda i: (0, 0)),
            scratch_shapes=[
                pltpu.VMEM((T * Bp, G), jnp.float32),   # pre-gates, current layer
            ],
        ),
        compiler_params=pltpu.CompilerParams(
            dimension_semantics=("arbitrary",),          # single step, sequential
            vmem_limit_bytes=vmem_limit),
    )(*inputs)
    return y[:B]


# ----------------------------------------------------------------------------
# Pure-JAX reference (PyTorch semantics, PyTorch [i,f,g,o] gate order)
# ----------------------------------------------------------------------------
def reference_forward(x_btd, params):
    x = x_btd  # (B, T, D)
    B = x.shape[0]
    for (w_ih, w_hh, bias) in params["lstm"]:
        H = w_hh.shape[0]
        h0 = jnp.zeros((B, H), jnp.float32)
        c0 = jnp.zeros((B, H), jnp.float32)

        def step(carry, x_t):
            h, c = carry
            gates = x_t @ w_ih + h @ w_hh + bias[0]
            i = jax.nn.sigmoid(gates[:, 0 * H:1 * H])
            f = jax.nn.sigmoid(gates[:, 1 * H:2 * H])
            g = jnp.tanh(gates[:, 2 * H:3 * H])
            o = jax.nn.sigmoid(gates[:, 3 * H:4 * H])
            c = f * c + i * g
            h = o * jnp.tanh(c)
            return (h, c), h

        _, hs = lax.scan(step, (h0, c0), jnp.transpose(x, (1, 0, 2)))
        x = jnp.transpose(hs, (1, 0, 2))
    y = x[:, -1, :] @ params["lin_w"] + params["lin_b"][0]
    return y


# ----------------------------------------------------------------------------
# Deterministic parameter initialization (synthetic, PyTorch shapes/order)
# ----------------------------------------------------------------------------
def init_params(key, input_size, hidden_size, output_size, num_layers):
    params = {"lstm": []}
    for layer in range(num_layers):
        d_in = input_size if layer == 0 else hidden_size
        key, k1, k2, k3, k4 = jax.random.split(key, 5)
        scale = 1.0 / np.sqrt(hidden_size)
        # PyTorch stores weight_ih as (4H, D_in); we pre-transpose to (D_in, 4H).
        w_ih = jax.random.uniform(k1, (d_in, 4 * hidden_size), jnp.float32,
                                  -scale, scale)
        w_hh = jax.random.uniform(k2, (hidden_size, 4 * hidden_size), jnp.float32,
                                  -scale, scale)
        b_ih = jax.random.uniform(k3, (4 * hidden_size,), jnp.float32, -scale, scale)
        b_hh = jax.random.uniform(k4, (4 * hidden_size,), jnp.float32, -scale, scale)
        bias = (b_ih + b_hh).reshape(1, 4 * hidden_size)
        params["lstm"].append((w_ih, w_hh, bias))
    key, k5, k6 = jax.random.split(key, 3)
    scale = 1.0 / np.sqrt(hidden_size)
    # PyTorch Linear weight is (O, H); pre-transpose to (H, O).
    params["lin_w"] = jax.random.uniform(k5, (hidden_size, output_size),
                                         jnp.float32, -scale, scale)
    params["lin_b"] = jax.random.uniform(k6, (1, output_size),
                                         jnp.float32, -scale, scale)
    return params


# ----------------------------------------------------------------------------
if __name__ == "__main__":
    input_size, hidden_size, output_size, num_layers = 16, 32, 8, 2
    B, T = 2, 8

    key = jax.random.PRNGKey(0)
    key, xkey = jax.random.split(key)
    x = jax.random.normal(xkey, (B, T, input_size), jnp.float32)

    params = init_params(key, input_size, hidden_size, output_size, num_layers)
    packed = pack_params(params)   # gate reorder + stacking, done once

    y = simple_lstm_forward(x, packed)
    y = jax.block_until_ready(y)

    y_ref = reference_forward(x, params)
    np.testing.assert_allclose(np.asarray(y), np.asarray(y_ref),
                               rtol=1e-4, atol=1e-4)

    assert y.shape == (B, output_size)
    print("KERNEL_OK")
</pallas_src>

<mosaic_0001>
module attributes {stable_mosaic.version = 11 : i64} {
  func.func @kernel(%arg0: i32, %arg1: memref<64x16xf32, #tpu.memory_space<vmem>>, %arg2: memref<16x128xf32, #tpu.memory_space<vmem>>, %arg3: memref<1x128xf32, #tpu.memory_space<vmem>>, %arg4: memref<1x32x128xf32, #tpu.memory_space<vmem>>, %arg5: memref<1x1x128xf32, #tpu.memory_space<vmem>>, %arg6: memref<2x32x128xf32, #tpu.memory_space<vmem>>, %arg7: memref<32x8xf32, #tpu.memory_space<vmem>>, %arg8: memref<1x8xf32, #tpu.memory_space<vmem>>, %arg9: memref<8x8xf32, #tpu.memory_space<vmem>>, %arg10: memref<64x128xf32, #tpu.memory_space<vmem>>) attributes {dimension_semantics = [#tpu.dimension_semantics<arbitrary>], iteration_bounds = array<i64: 1>, scalar_prefetch = 0 : i64, scratch_operands = 1 : i64, tpu.core_type = #tpu.core_type<tc>, window_params = [{pipeline_mode = #tpu.pipeline_mode<synchronous>, transform_indices = @transform_0, window_bounds = array<i64: 64, 16>}, {pipeline_mode = #tpu.pipeline_mode<synchronous>, transform_indices = @transform_1, window_bounds = array<i64: 16, 128>}, {pipeline_mode = #tpu.pipeline_mode<synchronous>, transform_indices = @transform_2, window_bounds = array<i64: 1, 128>}, {pipeline_mode = #tpu.pipeline_mode<synchronous>, transform_indices = @transform_3, window_bounds = array<i64: 1, 32, 128>}, {pipeline_mode = #tpu.pipeline_mode<synchronous>, transform_indices = @transform_4, window_bounds = array<i64: 1, 1, 128>}, {pipeline_mode = #tpu.pipeline_mode<synchronous>, transform_indices = @transform_5, window_bounds = array<i64: 2, 32, 128>}, {pipeline_mode = #tpu.pipeline_mode<synchronous>, transform_indices = @transform_6, window_bounds = array<i64: 32, 8>}, {pipeline_mode = #tpu.pipeline_mode<synchronous>, transform_indices = @transform_7, window_bounds = array<i64: 1, 8>}, {pipeline_mode = #tpu.pipeline_mode<synchronous>, transform_indices = @transform_8, window_bounds = array<i64: 8, 8>}]} {
    %c0 = arith.constant 0 : index
    %c0_0 = arith.constant 0 : index
    %0 = vector.load %arg1[%c0, %c0_0] : memref<64x16xf32, #tpu.memory_space<vmem>>, vector<64x16xf32>
    %c0_1 = arith.constant 0 : index
    %c0_2 = arith.constant 0 : index
    %1 = vector.load %arg2[%c0_1, %c0_2] : memref<16x128xf32, #tpu.memory_space<vmem>>, vector<16x128xf32>
    %cst = arith.constant dense<0.000000e+00> : vector<64x128xf32>
    %2 = tpu.matmul %0, %1, %cst {dimension_numbers = #tpu.dot_dimension_numbers<[1], [0], [0], [1], [0, 0, 1, 1], [], []>} : vector<64x16xf32>, vector<16x128xf32>, vector<64x128xf32> -> vector<64x128xf32>
    %c0_3 = arith.constant 0 : index
    %c0_4 = arith.constant 0 : index
    %3 = vector.load %arg3[%c0_3, %c0_4] : memref<1x128xf32, #tpu.memory_space<vmem>>, vector<1x128xf32>
    %4 = vector.broadcast %3 : vector<1x128xf32> to vector<64x128xf32>
    %5 = arith.addf %2, %4 : vector<64x128xf32>
    %c0_5 = arith.constant 0 : index
    %c0_6 = arith.constant 0 : index
    %6 = vector.load %arg10[%c0_5, %c0_6] : memref<64x128xf32, #tpu.memory_space<vmem>>, vector<64x128xf32>
    tpu.vector_store %arg10[%c0_5, %c0_6], %5 {strides = array<i32>} : memref<64x128xf32, #tpu.memory_space<vmem>>, vector<64x128xf32>,
    %c0_7 = arith.constant 0 : index
    %c0_8 = arith.constant 0 : index
    %c0_9 = arith.constant 0 : index
    %7 = vector.load %arg6[%c0_7, %c0_8, %c0_9] : memref<2x32x128xf32, #tpu.memory_space<vmem>>, vector<1x32x128xf32>
    %8 = vector.shape_cast %7 : vector<1x32x128xf32> to vector<32x128xf32>
    %cst_10 = arith.constant 0.000000e+00 : f32
    %9 = vector.broadcast %cst_10 : f32 to vector<8x32xf32>
    %cst_11 = arith.constant 0.000000e+00 : f32
    %10 = vector.broadcast %cst_11 : f32 to vector<8x32xf32>
    %c0_12 = arith.constant 0 : index
    %c0_13 = arith.constant 0 : index
    %11 = vector.load %arg10[%c0_12, %c0_13] : memref<64x128xf32, #tpu.memory_space<vmem>>, vector<8x128xf32>
    %cst_14 = arith.constant dense<0.000000e+00> : vector<8x128xf32>
    %12 = tpu.matmul %9, %8, %cst_14 {dimension_numbers = #tpu.dot_dimension_numbers<[1], [0], [0], [1], [0, 0, 1, 1], [], []>} : vector<8x32xf32>, vector<32x128xf32>, vector<8x128xf32> -> vector<8x128xf32>
    %13 = arith.addf %11, %12 : vector<8x128xf32>
    %14 = vector.extract_strided_slice %13 {offsets = [0, 0], sizes = [8, 96], strides = [1, 1]} : vector<8x128xf32> to vector<8x96xf32>
    %15 = arith.negf %14 : vector<8x96xf32>
    %16 = math.exp %15 : vector<8x96xf32>
    %cst_15 = arith.constant 1.000000e+00 : f32
    %17 = vector.broadcast %cst_15 : f32 to vector<8x96xf32>
    %18 = arith.addf %17, %16 : vector<8x96xf32>
    %19 = arith.divf %17, %18 : vector<8x96xf32>
    %20 = vector.extract_strided_slice %13 {offsets = [0, 96], sizes = [8, 32], strides = [1, 1]} : vector<8x128xf32> to vector<8x32xf32>
    %21 = math.tanh %20 : vector<8x32xf32>
    %22 = vector.extract_strided_slice %19 {offsets = [0, 0], sizes = [8, 32], strides = [1, 1]} : vector<8x96xf32> to vector<8x32xf32>
    %23 = vector.extract_strided_slice %19 {offsets = [0, 32], sizes = [8, 32], strides = [1, 1]} : vector<8x96xf32> to vector<8x32xf32>
    %24 = vector.extract_strided_slice %19 {offsets = [0, 64], sizes = [8, 32], strides = [1, 1]} : vector<8x96xf32> to vector<8x32xf32>
    %25 = arith.mulf %23, %10 : vector<8x32xf32>
    %26 = arith.mulf %22, %21 : vector<8x32xf32>
    %27 = arith.addf %25, %26 : vector<8x32xf32>
    %28 = math.tanh %27 : vector<8x32xf32>
    %29 = arith.mulf %24, %28 : vector<8x32xf32>
    %c8 = arith.constant 8 : index
    %c0_16 = arith.constant 0 : index
    %30 = vector.load %arg10[%c8, %c0_16] : memref<64x128xf32, #tpu.memory_space<vmem>>, vector<8x128xf32>
    %cst_17 = arith.constant dense<0.000000e+00> : vector<8x128xf32>
    %31 = tpu.matmul %29, %8, %cst_17 {dimension_numbers = #tpu.dot_dimension_numbers<[1], [0], [0], [1], [0, 0, 1, 1], [], []>} : vector<8x32xf32>, vector<32x128xf32>, vector<8x128xf32> -> vector<8x128xf32>
    %32 = arith.addf %30, %31 : vector<8x128xf32>
    %33 = vector.extract_strided_slice %32 {offsets = [0, 0], sizes = [8, 96], strides = [1, 1]} : vector<8x128xf32> to vector<8x96xf32>
    %34 = arith.negf %33 : vector<8x96xf32>
    %35 = math.exp %34 : vector<8x96xf32>
    %cst_18 = arith.constant 1.000000e+00 : f32
    %36 = vector.broadcast %cst_18 : f32 to vector<8x96xf32>
    %37 = arith.addf %36, %35 : vector<8x96xf32>
    %38 = arith.divf %36, %37 : vector<8x96xf32>
    %39 = vector.extract_strided_slice %32 {offsets = [0, 96], sizes = [8, 32], strides = [1, 1]} : vector<8x128xf32> to vector<8x32xf32>
    %40 = math.tanh %39 : vector<8x32xf32>
    %41 = vector.extract_strided_slice %38 {offsets = [0, 0], sizes = [8, 32], strides = [1, 1]} : vector<8x96xf32> to vector<8x32xf32>
    %42 = vector.extract_strided_slice %38 {offsets = [0, 32], sizes = [8, 32], strides = [1, 1]} : vector<8x96xf32> to vector<8x32xf32>
    %43 = vector.extract_strided_slice %38 {offsets = [0, 64], sizes = [8, 32], strides = [1, 1]} : vector<8x96xf32> to vector<8x32xf32>
    %44 = arith.mulf %42, %27 : vector<8x32xf32>
    %45 = arith.mulf %41, %40 : vector<8x32xf32>
    %46 = arith.addf %44, %45 : vector<8x32xf32>
    %47 = math.tanh %46 : vector<8x32xf32>
    %48 = arith.mulf %43, %47 : vector<8x32xf32>
    %c16 = arith.constant 16 : index
    %c0_19 = arith.constant 0 : index
    %49 = vector.load %arg10[%c16, %c0_19] : memref<64x128xf32, #tpu.memory_space<vmem>>, vector<8x128xf32>
    %cst_20 = arith.constant dense<0.000000e+00> : vector<8x128xf32>
    %50 = tpu.matmul %48, %8, %cst_20 {dimension_numbers = #tpu.dot_dimension_numbers<[1], [0], [0], [1], [0, 0, 1, 1], [], []>} : vector<8x32xf32>, vector<32x128xf32>, vector<8x128xf32> -> vector<8x128xf32>
    %51 = arith.addf %49, %50 : vector<8x128xf32>
    %52 = vector.extract_strided_slice %51 {offsets = [0, 0], sizes = [8, 96], strides = [1, 1]} : vector<8x128xf32> to vector<8x96xf32>
    %53 = arith.negf %52 : vector<8x96xf32>
    %54 = math.exp %53 : vector<8x96xf32>
    %cst_21 = arith.constant 1.000000e+00 : f32
    %55 = vector.broadcast %cst_21 : f32 to vector<8x96xf32>
    %56 = arith.addf %55, %54 : vector<8x96xf32>
    %57 = arith.divf %55, %56 : vector<8x96xf32>
    %58 = vector.extract_strided_slice %51 {offsets = [0, 96], sizes = [8, 32], strides = [1, 1]} : vector<8x128xf32> to vector<8x32xf32>
    %59 = math.tanh %58 : vector<8x32xf32>
    %60 = vector.extract_strided_slice %57 {offsets = [0, 0], sizes = [8, 32], strides = [1, 1]} : vector<8x96xf32> to vector<8x32xf32>
    %61 = vector.extract_strided_slice %57 {offsets = [0, 32], sizes = [8, 32], strides = [1, 1]} : vector<8x96xf32> to vector<8x32xf32>
    %62 = vector.extract_strided_slice %57 {offsets = [0, 64], sizes = [8, 32], strides = [1, 1]} : vector<8x96xf32> to vector<8x32xf32>
    %63 = arith.mulf %61, %46 : vector<8x32xf32>
    %64 = arith.mulf %60, %59 : vector<8x32xf32>
    %65 = arith.addf %63, %64 : vector<8x32xf32>
    %66 = math.tanh %65 : vector<8x32xf32>
    %67 = arith.mulf %62, %66 : vector<8x32xf32>
    %c24 = arith.constant 24 : index
    %c0_22 = arith.constant 0 : index
    %68 = vector.load %arg10[%c24, %c0_22] : memref<64x128xf32, #tpu.memory_space<vmem>>, vector<8x128xf32>
    %cst_23 = arith.constant dense<0.000000e+00> : vector<8x128xf32>
    %69 = tpu.matmul %67, %8, %cst_23 {dimension_numbers = #tpu.dot_dimension_numbers<[1], [0], [0], [1], [0, 0, 1, 1], [], []>} : vector<8x32xf32>, vector<32x128xf32>, vector<8x128xf32> -> vector<8x128xf32>
    %70 = arith.addf %68, %69 : vector<8x128xf32>
    %71 = vector.extract_strided_slice %70 {offsets = [0, 0], sizes = [8, 96], strides = [1, 1]} : vector<8x128xf32> to vector<8x96xf32>
    %72 = arith.negf %71 : vector<8x96xf32>
    %73 = math.exp %72 : vector<8x96xf32>
    %cst_24 = arith.constant 1.000000e+00 : f32
    %74 = vector.broadcast %cst_24 : f32 to vector<8x96xf32>
    %75 = arith.addf %74, %73 : vector<8x96xf32>
    %76 = arith.divf %74, %75 : vector<8x96xf32>
    %77 = vector.extract_strided_slice %70 {offsets = [0, 96], sizes = [8, 32], strides = [1, 1]} : vector<8x128xf32> to vector<8x32xf32>
    %78 = math.tanh %77 : vector<8x32xf32>
    %79 = vector.extract_strided_slice %76 {offsets = [0, 0], sizes = [8, 32], strides = [1, 1]} : vector<8x96xf32> to vector<8x32xf32>
    %80 = vector.extract_strided_slice %76 {offsets = [0, 32], sizes = [8, 32], strides = [1, 1]} : vector<8x96xf32> to vector<8x32xf32>
    %81 = vector.extract_strided_slice %76 {offsets = [0, 64], sizes = [8, 32], strides = [1, 1]} : vector<8x96xf32> to vector<8x32xf32>
    %82 = arith.mulf %80, %65 : vector<8x32xf32>
    %83 = arith.mulf %79, %78 : vector<8x32xf32>
    %84 = arith.addf %82, %83 : vector<8x32xf32>
    %85 = math.tanh %84 : vector<8x32xf32>
    %86 = arith.mulf %81, %85 : vector<8x32xf32>
    %c32 = arith.constant 32 : index
    %c0_25 = arith.constant 0 : index
    %87 = vector.load %arg10[%c32, %c0_25] : memref<64x128xf32, #tpu.memory_space<vmem>>, vector<8x128xf32>
    %cst_26 = arith.constant dense<0.000000e+00> : vector<8x128xf32>
    %88 = tpu.matmul %86, %8, %cst_26 {dimension_numbers = #tpu.dot_dimension_numbers<[1], [0], [0], [1], [0, 0, 1, 1], [], []>} : vector<8x32xf32>, vector<32x128xf32>, vector<8x128xf32> -> vector<8x128xf32>
    %89 = arith.addf %87, %88 : vector<8x128xf32>
    %90 = vector.extract_strided_slice %89 {offsets = [0, 0], sizes = [8, 96], strides = [1, 1]} : vector<8x128xf32> to vector<8x96xf32>
    %91 = arith.negf %90 : vector<8x96xf32>
    %92 = math.exp %91 : vector<8x96xf32>
    %cst_27 = arith.constant 1.000000e+00 : f32
    %93 = vector.broadcast %cst_27 : f32 to vector<8x96xf32>
    %94 = arith.addf %93, %92 : vector<8x96xf32>
    %95 = arith.divf %93, %94 : vector<8x96xf32>
    %96 = vector.extract_strided_slice %89 {offsets = [0, 96], sizes = [8, 32], strides = [1, 1]} : vector<8x128xf32> to vector<8x32xf32>
    %97 = math.tanh %96 : vector<8x32xf32>
    %98 = vector.extract_strided_slice %95 {offsets = [0, 0], sizes = [8, 32], strides = [1, 1]} : vector<8x96xf32> to vector<8x32xf32>
    %99 = vector.extract_strided_slice %95 {offsets = [0, 32], sizes = [8, 32], strides = [1, 1]} : vector<8x96xf32> to vector<8x32xf32>
    %100 = vector.extract_strided_slice %95 {offsets = [0, 64], sizes = [8, 32], strides = [1, 1]} : vector<8x96xf32> to vector<8x32xf32>
    %101 = arith.mulf %99, %84 : vector<8x32xf32>
    %102 = arith.mulf %98, %97 : vector<8x32xf32>
    %103 = arith.addf %101, %102 : vector<8x32xf32>
    %104 = math.tanh %103 : vector<8x32xf32>
    %105 = arith.mulf %100, %104 : vector<8x32xf32>
    %c40 = arith.constant 40 : index
    %c0_28 = arith.constant 0 : index
    %106 = vector.load %arg10[%c40, %c0_28] : memref<64x128xf32, #tpu.memory_space<vmem>>, vector<8x128xf32>
    %cst_29 = arith.constant dense<0.000000e+00> : vector<8x128xf32>
    %107 = tpu.matmul %105, %8, %cst_29 {dimension_numbers = #tpu.dot_dimension_numbers<[1], [0], [0], [1], [0, 0, 1, 1], [], []>} : vector<8x32xf32>, vector<32x128xf32>, vector<8x128xf32> -> vector<8x128xf32>
    %108 = arith.addf %106, %107 : vector<8x128xf32>
    %109 = vector.extract_strided_slice %108 {offsets = [0, 0], sizes = [8, 96], strides = [1, 1]} : vector<8x128xf32> to vector<8x96xf32>
    %110 = arith.negf %109 : vector<8x96xf32>
    %111 = math.exp %110 : vector<8x96xf32>
    %cst_30 = arith.constant 1.000000e+00 : f32
    %112 = vector.broadcast %cst_30 : f32 to vector<8x96xf32>
    %113 = arith.addf %112, %111 : vector<8x96xf32>
    %114 = arith.divf %112, %113 : vector<8x96xf32>
    %115 = vector.extract_strided_slice %108 {offsets = [0, 96], sizes = [8, 32], strides = [1, 1]} : vector<8x128xf32> to vector<8x32xf32>
    %116 = math.tanh %115 : vector<8x32xf32>
    %117 = vector.extract_strided_slice %114 {offsets = [0, 0], sizes = [8, 32], strides = [1, 1]} : vector<8x96xf32> to vector<8x32xf32>
    %118 = vector.extract_strided_slice %114 {offsets = [0, 32], sizes = [8, 32], strides = [1, 1]} : vector<8x96xf32> to vector<8x32xf32>
    %119 = vector.extract_strided_slice %114 {offsets = [0, 64], sizes = [8, 32], strides = [1, 1]} : vector<8x96xf32> to vector<8x32xf32>
    %120 = arith.mulf %118, %103 : vector<8x32xf32>
    %121 = arith.mulf %117, %116 : vector<8x32xf32>
    %122 = arith.addf %120, %121 : vector<8x32xf32>
    %123 = math.tanh %122 : vector<8x32xf32>
    %124 = arith.mulf %119, %123 : vector<8x32xf32>
    %c48 = arith.constant 48 : index
    %c0_31 = arith.constant 0 : index
    %125 = vector.load %arg10[%c48, %c0_31] : memref<64x128xf32, #tpu.memory_space<vmem>>, vector<8x128xf32>
    %cst_32 = arith.constant dense<0.000000e+00> : vector<8x128xf32>
    %126 = tpu.matmul %124, %8, %cst_32 {dimension_numbers = #tpu.dot_dimension_numbers<[1], [0], [0], [1], [0, 0, 1, 1], [], []>} : vector<8x32xf32>, vector<32x128xf32>, vector<8x128xf32> -> vector<8x128xf32>
    %127 = arith.addf %125, %126 : vector<8x128xf32>
    %128 = vector.extract_strided_slice %127 {offsets = [0, 0], sizes = [8, 96], strides = [1, 1]} : vector<8x128xf32> to vector<8x96xf32>
    %129 = arith.negf %128 : vector<8x96xf32>
    %130 = math.exp %129 : vector<8x96xf32>
    %cst_33 = arith.constant 1.000000e+00 : f32
    %131 = vector.broadcast %cst_33 : f32 to vector<8x96xf32>
    %132 = arith.addf %131, %130 : vector<8x96xf32>
    %133 = arith.divf %131, %132 : vector<8x96xf32>
    %134 = vector.extract_strided_slice %127 {offsets = [0, 96], sizes = [8, 32], strides = [1, 1]} : vector<8x128xf32> to vector<8x32xf32>
    %135 = math.tanh %134 : vector<8x32xf32>
    %136 = vector.extract_strided_slice %133 {offsets = [0, 0], sizes = [8, 32], strides = [1, 1]} : vector<8x96xf32> to vector<8x32xf32>
    %137 = vector.extract_strided_slice %133 {offsets = [0, 32], sizes = [8, 32], strides = [1, 1]} : vector<8x96xf32> to vector<8x32xf32>
    %138 = vector.extract_strided_slice %133 {offsets = [0, 64], sizes = [8, 32], strides = [1, 1]} : vector<8x96xf32> to vector<8x32xf32>
    %139 = arith.mulf %137, %122 : vector<8x32xf32>
    %140 = arith.mulf %136, %135 : vector<8x32xf32>
    %141 = arith.addf %139, %140 : vector<8x32xf32>
    %142 = math.tanh %141 : vector<8x32xf32>
    %143 = arith.mulf %138, %142 : vector<8x32xf32>
    %c56 = arith.constant 56 : index
    %c0_34 = arith.constant 0 : index
    %144 = vector.load %arg10[%c56, %c0_34] : memref<64x128xf32, #tpu.memory_space<vmem>>, vector<8x128xf32>
    %cst_35 = arith.constant dense<0.000000e+00> : vector<8x128xf32>
    %145 = tpu.matmul %143, %8, %cst_35 {dimension_numbers = #tpu.dot_dimension_numbers<[1], [0], [0], [1], [0, 0, 1, 1], [], []>} : vector<8x32xf32>, vector<32x128xf32>, vector<8x128xf32> -> vector<8x128xf32>
    %146 = arith.addf %144, %145 : vector<8x128xf32>
    %147 = vector.extract_strided_slice %146 {offsets = [0, 0], sizes = [8, 96], strides = [1, 1]} : vector<8x128xf32> to vector<8x96xf32>
    %148 = arith.negf %147 : vector<8x96xf32>
    %149 = math.exp %148 : vector<8x96xf32>
    %cst_36 = arith.constant 1.000000e+00 : f32
    %150 = vector.broadcast %cst_36 : f32 to vector<8x96xf32>
    %151 = arith.addf %150, %149 : vector<8x96xf32>
    %152 = arith.divf %150, %151 : vector<8x96xf32>
    %153 = vector.extract_strided_slice %146 {offsets = [0, 96], sizes = [8, 32], strides = [1, 1]} : vector<8x128xf32> to vector<8x32xf32>
    %154 = math.tanh %153 : vector<8x32xf32>
    %155 = vector.extract_strided_slice %152 {offsets = [0, 0], sizes = [8, 32], strides = [1, 1]} : vector<8x96xf32> to vector<8x32xf32>
    %156 = vector.extract_strided_slice %152 {offsets = [0, 32], sizes = [8, 32], strides = [1, 1]} : vector<8x96xf32> to vector<8x32xf32>
    %157 = vector.extract_strided_slice %152 {offsets = [0, 64], sizes = [8, 32], strides = [1, 1]} : vector<8x96xf32> to vector<8x32xf32>
    %158 = arith.mulf %156, %141 : vector<8x32xf32>
    %159 = arith.mulf %155, %154 : vector<8x32xf32>
    %160 = arith.addf %158, %159 : vector<8x32xf32>
    %161 = math.tanh %160 : vector<8x32xf32>
    %162 = arith.mulf %157, %161 : vector<8x32xf32>
    %163 = tpu.concatenate %29, %48, %67, %86, %105, %124, %143, %162 in 0 : vector<8x32xf32>, vector<8x32xf32>, vector<8x32xf32>, vector<8x32xf32>, vector<8x32xf32>, vector<8x32xf32>, vector<8x32xf32>, vector<8x32xf32> -> vector<64x32xf32>
    %c0_37 = arith.constant 0 : index
    %c0_38 = arith.constant 0 : index
    %c0_39 = arith.constant 0 : index
    %164 = vector.load %arg4[%c0_37, %c0_38, %c0_39] : memref<1x32x128xf32, #tpu.memory_space<vmem>>, vector<1x32x128xf32>
    %165 = vector.shape_cast %164 : vector<1x32x128xf32> to vector<32x128xf32>
    %cst_40 = arith.constant dense<0.000000e+00> : vector<64x128xf32>
    %166 = tpu.matmul %163, %165, %cst_40 {dimension_numbers = #tpu.dot_dimension_numbers<[1], [0], [0], [1], [0, 0, 1, 1], [], []>} : vector<64x32xf32>, vector<32x128xf32>, vector<64x128xf32> -> vector<64x128xf32>
    %c0_41 = arith.constant 0 : index
    %c0_42 = arith.constant 0 : index
    %c0_43 = arith.constant 0 : index
    %167 = vector.load %arg5[%c0_41, %c0_42, %c0_43] : memref<1x1x128xf32, #tpu.memory_space<vmem>>, vector<1x1x128xf32>
    %168 = vector.shape_cast %167 : vector<1x1x128xf32> to vector<1x128xf32>
    %169 = vector.broadcast %168 : vector<1x128xf32> to vector<64x128xf32>
    %170 = arith.addf %166, %169 : vector<64x128xf32>
    %c0_44 = arith.constant 0 : index
    %c0_45 = arith.constant 0 : index
    %171 = vector.load %arg10[%c0_44, %c0_45] : memref<64x128xf32, #tpu.memory_space<vmem>>, vector<64x128xf32>
    tpu.vector_store %arg10[%c0_44, %c0_45], %170 {strides = array<i32>} : memref<64x128xf32, #tpu.memory_space<vmem>>, vector<64x128xf32>,
    %c1 = arith.constant 1 : index
    %c0_46 = arith.constant 0 : index
    %c0_47 = arith.constant 0 : index
    %172 = vector.load %arg6[%c1, %c0_46, %c0_47] : memref<2x32x128xf32, #tpu.memory_space<vmem>>, vector<1x32x128xf32>
    %173 = vector.shape_cast %172 : vector<1x32x128xf32> to vector<32x128xf32>
    %cst_48 = arith.constant 0.000000e+00 : f32
    %174 = vector.broadcast %cst_48 : f32 to vector<8x32xf32>
    %cst_49 = arith.constant 0.000000e+00 : f32
    %175 = vector.broadcast %cst_49 : f32 to vector<8x32xf32>
    %c0_50 = arith.constant 0 : index
    %c0_51 = arith.constant 0 : index
    %176 = vector.load %arg10[%c0_50, %c0_51] : memref<64x128xf32, #tpu.memory_space<vmem>>, vector<8x128xf32>
    %cst_52 = arith.constant dense<0.000000e+00> : vector<8x128xf32>
    %177 = tpu.matmul %174, %173, %cst_52 {dimension_numbers = #tpu.dot_dimension_numbers<[1], [0], [0], [1], [0, 0, 1, 1], [], []>} : vector<8x32xf32>, vector<32x128xf32>, vector<8x128xf32> -> vector<8x128xf32>
    %178 = arith.addf %176, %177 : vector<8x128xf32>
    %179 = vector.extract_strided_slice %178 {offsets = [0, 0], sizes = [8, 96], strides = [1, 1]} : vector<8x128xf32> to vector<8x96xf32>
    %180 = arith.negf %179 : vector<8x96xf32>
    %181 = math.exp %180 : vector<8x96xf32>
    %cst_53 = arith.constant 1.000000e+00 : f32
    %182 = vector.broadcast %cst_53 : f32 to vector<8x96xf32>
    %183 = arith.addf %182, %181 : vector<8x96xf32>
    %184 = arith.divf %182, %183 : vector<8x96xf32>
    %185 = vector.extract_strided_slice %178 {offsets = [0, 96], sizes = [8, 32], strides = [1, 1]} : vector<8x128xf32> to vector<8x32xf32>
    %186 = math.tanh %185 : vector<8x32xf32>
    %187 = vector.extract_strided_slice %184 {offsets = [0, 0], sizes = [8, 32], strides = [1, 1]} : vector<8x96xf32> to vector<8x32xf32>
    %188 = vector.extract_strided_slice %184 {offsets = [0, 32], sizes = [8, 32], strides = [1, 1]} : vector<8x96xf32> to vector<8x32xf32>
    %189 = vector.extract_strided_slice %184 {offsets = [0, 64], sizes = [8, 32], strides = [1, 1]} : vector<8x96xf32> to vector<8x32xf32>
    %190 = arith.mulf %188, %175 : vector<8x32xf32>
    %191 = arith.mulf %187, %186 : vector<8x32xf32>
    %192 = arith.addf %190, %191 : vector<8x32xf32>
    %193 = math.tanh %192 : vector<8x32xf32>
    %194 = arith.mulf %189, %193 : vector<8x32xf32>
    %c8_54 = arith.constant 8 : index
    %c0_55 = arith.constant 0 : index
    %195 = vector.load %arg10[%c8_54, %c0_55] : memref<64x128xf32, #tpu.memory_space<vmem>>, vector<8x128xf32>
    %cst_56 = arith.constant dense<0.000000e+00> : vector<8x128xf32>
    %196 = tpu.matmul %194, %173, %cst_56 {dimension_numbers = #tpu.dot_dimension_numbers<[1], [0], [0], [1], [0, 0, 1, 1], [], []>} : vector<8x32xf32>, vector<32x128xf32>, vector<8x128xf32> -> vector<8x128xf32>
    %197 = arith.addf %195, %196 : vector<8x128xf32>
    %198 = vector.extract_strided_slice %197 {offsets = [0, 0], sizes = [8, 96], strides = [1, 1]} : vector<8x128xf32> to vector<8x96xf32>
    %199 = arith.negf %198 : vector<8x96xf32>
    %200 = math.exp %199 : vector<8x96xf32>
    %cst_57 = arith.constant 1.000000e+00 : f32
    %201 = vector.broadcast %cst_57 : f32 to vector<8x96xf32>
    %202 = arith.addf %201, %200 : vector<8x96xf32>
    %203 = arith.divf %201, %202 : vector<8x96xf32>
    %204 = vector.extract_strided_slice %197 {offsets = [0, 96], sizes = [8, 32], strides = [1, 1]} : vector<8x128xf32> to vector<8x32xf32>
    %205 = math.tanh %204 : vector<8x32xf32>
    %206 = vector.extract_strided_slice %203 {offsets = [0, 0], sizes = [8, 32], strides = [1, 1]} : vector<8x96xf32> to vector<8x32xf32>
    %207 = vector.extract_strided_slice %203 {offsets = [0, 32], sizes = [8, 32], strides = [1, 1]} : vector<8x96xf32> to vector<8x32xf32>
    %208 = vector.extract_strided_slice %203 {offsets = [0, 64], sizes = [8, 32], strides = [1, 1]} : vector<8x96xf32> to vector<8x32xf32>
    %209 = arith.mulf %207, %192 : vector<8x32xf32>
    %210 = arith.mulf %206, %205 : vector<8x32xf32>
    %211 = arith.addf %209, %210 : vector<8x32xf32>
    %212 = math.tanh %211 : vector<8x32xf32>
    %213 = arith.mulf %208, %212 : vector<8x32xf32>
    %c16_58 = arith.constant 16 : index
    %c0_59 = arith.constant 0 : index
    %214 = vector.load %arg10[%c16_58, %c0_59] : memref<64x128xf32, #tpu.memory_space<vmem>>, vector<8x128xf32>
    %cst_60 = arith.constant dense<0.000000e+00> : vector<8x128xf32>
    %215 = tpu.matmul %213, %173, %cst_60 {dimension_numbers = #tpu.dot_dimension_numbers<[1], [0], [0], [1], [0, 0, 1, 1], [], []>} : vector<8x32xf32>, vector<32x128xf32>, vector<8x128xf32> -> vector<8x128xf32>
    %216 = arith.addf %214, %215 : vector<8x128xf32>
    %217 = vector.extract_strided_slice %216 {offsets = [0, 0], sizes = [8, 96], strides = [1, 1]} : vector<8x128xf32> to vector<8x96xf32>
    %218 = arith.negf %217 : vector<8x96xf32>
    %219 = math.exp %218 : vector<8x96xf32>
    %cst_61 = arith.constant 1.000000e+00 : f32
    %220 = vector.broadcast %cst_61 : f32 to vector<8x96xf32>
    %221 = arith.addf %220, %219 : vector<8x96xf32>
    %222 = arith.divf %220, %221 : vector<8x96xf32>
    %223 = vector.extract_strided_slice %216 {offsets = [0, 96], sizes = [8, 32], strides = [1, 1]} : vector<8x128xf32> to vector<8x32xf32>
    %224 = math.tanh %223 : vector<8x32xf32>
    %225 = vector.extract_strided_slice %222 {offsets = [0, 0], sizes = [8, 32], strides = [1, 1]} : vector<8x96xf32> to vector<8x32xf32>
    %226 = vector.extract_strided_slice %222 {offsets = [0, 32], sizes = [8, 32], strides = [1, 1]} : vector<8x96xf32> to vector<8x32xf32>
    %227 = vector.extract_strided_slice %222 {offsets = [0, 64], sizes = [8, 32], strides = [1, 1]} : vector<8x96xf32> to vector<8x32xf32>
    %228 = arith.mulf %226, %211 : vector<8x32xf32>
    %229 = arith.mulf %225, %224 : vector<8x32xf32>
    %230 = arith.addf %228, %229 : vector<8x32xf32>
    %231 = math.tanh %230 : vector<8x32xf32>
    %232 = arith.mulf %227, %231 : vector<8x32xf32>
    %c24_62 = arith.constant 24 : index
    %c0_63 = arith.constant 0 : index
    %233 = vector.load %arg10[%c24_62, %c0_63] : memref<64x128xf32, #tpu.memory_space<vmem>>, vector<8x128xf32>
    %cst_64 = arith.constant dense<0.000000e+00> : vector<8x128xf32>
    %234 = tpu.matmul %232, %173, %cst_64 {dimension_numbers = #tpu.dot_dimension_numbers<[1], [0], [0], [1], [0, 0, 1, 1], [], []>} : vector<8x32xf32>, vector<32x128xf32>, vector<8x128xf32> -> vector<8x128xf32>
    %235 = arith.addf %233, %234 : vector<8x128xf32>
    %236 = vector.extract_strided_slice %235 {offsets = [0, 0], sizes = [8, 96], strides = [1, 1]} : vector<8x128xf32> to vector<8x96xf32>
    %237 = arith.negf %236 : vector<8x96xf32>
    %238 = math.exp %237 : vector<8x96xf32>
    %cst_65 = arith.constant 1.000000e+00 : f32
    %239 = vector.broadcast %cst_65 : f32 to vector<8x96xf32>
    %240 = arith.addf %239, %238 : vector<8x96xf32>
    %241 = arith.divf %239, %240 : vector<8x96xf32>
    %242 = vector.extract_strided_slice %235 {offsets = [0, 96], sizes = [8, 32], strides = [1, 1]} : vector<8x128xf32> to vector<8x32xf32>
    %243 = math.tanh %242 : vector<8x32xf32>
    %244 = vector.extract_strided_slice %241 {offsets = [0, 0], sizes = [8, 32], strides = [1, 1]} : vector<8x96xf32> to vector<8x32xf32>
    %245 = vector.extract_strided_slice %241 {offsets = [0, 32], sizes = [8, 32], strides = [1, 1]} : vector<8x96xf32> to vector<8x32xf32>
    %246 = vector.extract_strided_slice %241 {offsets = [0, 64], sizes = [8, 32], strides = [1, 1]} : vector<8x96xf32> to vector<8x32xf32>
    %247 = arith.mulf %245, %230 : vector<8x32xf32>
    %248 = arith.mulf %244, %243 : vector<8x32xf32>
    %249 = arith.addf %247, %248 : vector<8x32xf32>
    %250 = math.tanh %249 : vector<8x32xf32>
    %251 = arith.mulf %246, %250 : vector<8x32xf32>
    %c32_66 = arith.constant 32 : index
    %c0_67 = arith.constant 0 : index
    %252 = vector.load %arg10[%c32_66, %c0_67] : memref<64x128xf32, #tpu.memory_space<vmem>>, vector<8x128xf32>
    %cst_68 = arith.constant dense<0.000000e+00> : vector<8x128xf32>
    %253 = tpu.matmul %251, %173, %cst_68 {dimension_numbers = #tpu.dot_dimension_numbers<[1], [0], [0], [1], [0, 0, 1, 1], [], []>} : vector<8x32xf32>, vector<32x128xf32>, vector<8x128xf32> -> vector<8x128xf32>
    %254 = arith.addf %252, %253 : vector<8x128xf32>
    %255 = vector.extract_strided_slice %254 {offsets = [0, 0], sizes = [8, 96], strides = [1, 1]} : vector<8x128xf32> to vector<8x96xf32>
    %256 = arith.negf %255 : vector<8x96xf32>
    %257 = math.exp %256 : vector<8x96xf32>
    %cst_69 = arith.constant 1.000000e+00 : f32
    %258 = vector.broadcast %cst_69 : f32 to vector<8x96xf32>
    %259 = arith.addf %258, %257 : vector<8x96xf32>
    %260 = arith.divf %258, %259 : vector<8x96xf32>
    %261 = vector.extract_strided_slice %254 {offsets = [0, 96], sizes = [8, 32], strides = [1, 1]} : vector<8x128xf32> to vector<8x32xf32>
    %262 = math.tanh %261 : vector<8x32xf32>
    %263 = vector.extract_strided_slice %260 {offsets = [0, 0], sizes = [8, 32], strides = [1, 1]} : vector<8x96xf32> to vector<8x32xf32>
    %264 = vector.extract_strided_slice %260 {offsets = [0, 32], sizes = [8, 32], strides = [1, 1]} : vector<8x96xf32> to vector<8x32xf32>
    %265 = vector.extract_strided_slice %260 {offsets = [0, 64], sizes = [8, 32], strides = [1, 1]} : vector<8x96xf32> to vector<8x32xf32>
    %266 = arith.mulf %264, %249 : vector<8x32xf32>
    %267 = arith.mulf %263, %262 : vector<8x32xf32>
    %268 = arith.addf %266, %267 : vector<8x32xf32>
    %269 = math.tanh %268 : vector<8x32xf32>
    %270 = arith.mulf %265, %269 : vector<8x32xf32>
    %c40_70 = arith.constant 40 : index
    %c0_71 = arith.constant 0 : index
    %271 = vector.load %arg10[%c40_70, %c0_71] : memref<64x128xf32, #tpu.memory_space<vmem>>, vector<8x128xf32>
    %cst_72 = arith.constant dense<0.000000e+00> : vector<8x128xf32>
    %272 = tpu.matmul %270, %173, %cst_72 {dimension_numbers = #tpu.dot_dimension_numbers<[1], [0], [0], [1], [0, 0, 1, 1], [], []>} : vector<8x32xf32>, vector<32x128xf32>, vector<8x128xf32> -> vector<8x128xf32>
    %273 = arith.addf %271, %272 : vector<8x128xf32>
    %274 = vector.extract_strided_slice %273 {offsets = [0, 0], sizes = [8, 96], strides = [1, 1]} : vector<8x128xf32> to vector<8x96xf32>
    %275 = arith.negf %274 : vector<8x96xf32>
    %276 = math.exp %275 : vector<8x96xf32>
    %cst_73 = arith.constant 1.000000e+00 : f32
    %277 = vector.broadcast %cst_73 : f32 to vector<8x96xf32>
    %278 = arith.addf %277, %276 : vector<8x96xf32>
    %279 = arith.divf %277, %278 : vector<8x96xf32>
    %280 = vector.extract_strided_slice %273 {offsets = [0, 96], sizes = [8, 32], strides = [1, 1]} : vector<8x128xf32> to vector<8x32xf32>
    %281 = math.tanh %280 : vector<8x32xf32>
    %282 = vector.extract_strided_slice %279 {offsets = [0, 0], sizes = [8, 32], strides = [1, 1]} : vector<8x96xf32> to vector<8x32xf32>
    %283 = vector.extract_strided_slice %279 {offsets = [0, 32], sizes = [8, 32], strides = [1, 1]} : vector<8x96xf32> to vector<8x32xf32>
    %284 = vector.extract_strided_slice %279 {offsets = [0, 64], sizes = [8, 32], strides = [1, 1]} : vector<8x96xf32> to vector<8x32xf32>
    %285 = arith.mulf %283, %268 : vector<8x32xf32>
    %286 = arith.mulf %282, %281 : vector<8x32xf32>
    %287 = arith.addf %285, %286 : vector<8x32xf32>
    %288 = math.tanh %287 : vector<8x32xf32>
    %289 = arith.mulf %284, %288 : vector<8x32xf32>
    %c48_74 = arith.constant 48 : index
    %c0_75 = arith.constant 0 : index
    %290 = vector.load %arg10[%c48_74, %c0_75] : memref<64x128xf32, #tpu.memory_space<vmem>>, vector<8x128xf32>
    %cst_76 = arith.constant dense<0.000000e+00> : vector<8x128xf32>
    %291 = tpu.matmul %289, %173, %cst_76 {dimension_numbers = #tpu.dot_dimension_numbers<[1], [0], [0], [1], [0, 0, 1, 1], [], []>} : vector<8x32xf32>, vector<32x128xf32>, vector<8x128xf32> -> vector<8x128xf32>
    %292 = arith.addf %290, %291 : vector<8x128xf32>
    %293 = vector.extract_strided_slice %292 {offsets = [0, 0], sizes = [8, 96], strides = [1, 1]} : vector<8x128xf32> to vector<8x96xf32>
    %294 = arith.negf %293 : vector<8x96xf32>
    %295 = math.exp %294 : vector<8x96xf32>
    %cst_77 = arith.constant 1.000000e+00 : f32
    %296 = vector.broadcast %cst_77 : f32 to vector<8x96xf32>
    %297 = arith.addf %296, %295 : vector<8x96xf32>
    %298 = arith.divf %296, %297 : vector<8x96xf32>
    %299 = vector.extract_strided_slice %292 {offsets = [0, 96], sizes = [8, 32], strides = [1, 1]} : vector<8x128xf32> to vector<8x32xf32>
    %300 = math.tanh %299 : vector<8x32xf32>
    %301 = vector.extract_strided_slice %298 {offsets = [0, 0], sizes = [8, 32], strides = [1, 1]} : vector<8x96xf32> to vector<8x32xf32>
    %302 = vector.extract_strided_slice %298 {offsets = [0, 32], sizes = [8, 32], strides = [1, 1]} : vector<8x96xf32> to vector<8x32xf32>
    %303 = vector.extract_strided_slice %298 {offsets = [0, 64], sizes = [8, 32], strides = [1, 1]} : vector<8x96xf32> to vector<8x32xf32>
    %304 = arith.mulf %302, %287 : vector<8x32xf32>
    %305 = arith.mulf %301, %300 : vector<8x32xf32>
    %306 = arith.addf %304, %305 : vector<8x32xf32>
    %307 = math.tanh %306 : vector<8x32xf32>
    %308 = arith.mulf %303, %307 : vector<8x32xf32>
    %c56_78 = arith.constant 56 : index
    %c0_79 = arith.constant 0 : index
    %309 = vector.load %arg10[%c56_78, %c0_79] : memref<64x128xf32, #tpu.memory_space<vmem>>, vector<8x128xf32>
    %cst_80 = arith.constant dense<0.000000e+00> : vector<8x128xf32>
    %310 = tpu.matmul %308, %173, %cst_80 {dimension_numbers = #tpu.dot_dimension_numbers<[1], [0], [0], [1], [0, 0, 1, 1], [], []>} : vector<8x32xf32>, vector<32x128xf32>, vector<8x128xf32> -> vector<8x128xf32>
    %311 = arith.addf %309, %310 : vector<8x128xf32>
    %312 = vector.extract_strided_slice %311 {offsets = [0, 0], sizes = [8, 96], strides = [1, 1]} : vector<8x128xf32> to vector<8x96xf32>
    %313 = arith.negf %312 : vector<8x96xf32>
    %314 = math.exp %313 : vector<8x96xf32>
    %cst_81 = arith.constant 1.000000e+00 : f32
    %315 = vector.broadcast %cst_81 : f32 to vector<8x96xf32>
    %316 = arith.addf %315, %314 : vector<8x96xf32>
    %317 = arith.divf %315, %316 : vector<8x96xf32>
    %318 = vector.extract_strided_slice %311 {offsets = [0, 96], sizes = [8, 32], strides = [1, 1]} : vector<8x128xf32> to vector<8x32xf32>
    %319 = math.tanh %318 : vector<8x32xf32>
    %320 = vector.extract_strided_slice %317 {offsets = [0, 0], sizes = [8, 32], strides = [1, 1]} : vector<8x96xf32> to vector<8x32xf32>
    %321 = vector.extract_strided_slice %317 {offsets = [0, 32], sizes = [8, 32], strides = [1, 1]} : vector<8x96xf32> to vector<8x32xf32>
    %322 = vector.extract_strided_slice %317 {offsets = [0, 64], sizes = [8, 32], strides = [1, 1]} : vector<8x96xf32> to vector<8x32xf32>
    %323 = arith.mulf %321, %306 : vector<8x32xf32>
    %324 = arith.mulf %320, %319 : vector<8x32xf32>
    %325 = arith.addf %323, %324 : vector<8x32xf32>
    %326 = math.tanh %325 : vector<8x32xf32>
    %327 = arith.mulf %322, %326 : vector<8x32xf32>
    %c0_82 = arith.constant 0 : index
    %c0_83 = arith.constant 0 : index
    %328 = vector.load %arg7[%c0_82, %c0_83] : memref<32x8xf32, #tpu.memory_space<vmem>>, vector<32x8xf32>
    %cst_84 = arith.constant dense<0.000000e+00> : vector<8x8xf32>
    %329 = tpu.matmul %327, %328, %cst_84 {dimension_numbers = #tpu.dot_dimension_numbers<[1], [0], [0], [1], [0, 0, 1, 1], [], []>} : vector<8x32xf32>, vector<32x8xf32>, vector<8x8xf32> -> vector<8x8xf32>
    %c0_85 = arith.constant 0 : index
    %c0_86 = arith.constant 0 : index
    %330 = vector.load %arg8[%c0_85, %c0_86] : memref<1x8xf32, #tpu.memory_space<vmem>>, vector<1x8xf32>
    %331 = vector.broadcast %330 : vector<1x8xf32> to vector<8x8xf32>
    %332 = arith.addf %329, %331 : vector<8x8xf32>
    %c0_87 = arith.constant 0 : index
    %c0_88 = arith.constant 0 : index
    %333 = vector.load %arg9[%c0_87, %c0_88] : memref<8x8xf32, #tpu.memory_space<vmem>>, vector<8x8xf32>
    tpu.vector_store %arg9[%c0_87, %c0_88], %332 {strides = array<i32>} : memref<8x8xf32, #tpu.memory_space<vmem>>, vector<8x8xf32>,
    return
  }
  func.func @transform_0(%arg0: i32) -> (i32, i32) {
    %c0_i32 = arith.constant 0 : i32
    %c0_i32_0 = arith.constant 0 : i32
    %c0_i32_1 = arith.constant 0 : i32
    return %c0_i32, %c0_i32_0 : i32, i32
  }
  func.func @transform_1(%arg0: i32) -> (i32, i32) {
    %c0_i32 = arith.constant 0 : i32
    %c0_i32_0 = arith.constant 0 : i32
    %c0_i32_1 = arith.constant 0 : i32
    return %c0_i32, %c0_i32_0 : i32, i32
  }
  func.func @transform_2(%arg0: i32) -> (i32, i32) {
    %c0_i32 = arith.constant 0 : i32
    %c0_i32_0 = arith.constant 0 : i32
    %c0_i32_1 = arith.constant 0 : i32
    return %c0_i32, %c0_i32_0 : i32, i32
  }
  func.func @transform_3(%arg0: i32) -> (i32, i32, i32) {
    %c0_i32 = arith.constant 0 : i32
    %c0_i32_0 = arith.constant 0 : i32
    %c0_i32_1 = arith.constant 0 : i32
    %c0_i32_2 = arith.constant 0 : i32
    return %c0_i32, %c0_i32_0, %c0_i32_1 : i32, i32, i32
  }
  func.func @transform_4(%arg0: i32) -> (i32, i32, i32) {
    %c0_i32 = arith.constant 0 : i32
    %c0_i32_0 = arith.constant 0 : i32
    %c0_i32_1 = arith.constant 0 : i32
    %c0_i32_2 = arith.constant 0 : i32
    return %c0_i32, %c0_i32_0, %c0_i32_1 : i32, i32, i32
  }
  func.func @transform_5(%arg0: i32) -> (i32, i32, i32) {
    %c0_i32 = arith.constant 0 : i32
    %c0_i32_0 = arith.constant 0 : i32
    %c0_i32_1 = arith.constant 0 : i32
    %c0_i32_2 = arith.constant 0 : i32
    return %c0_i32, %c0_i32_0, %c0_i32_1 : i32, i32, i32
  }
  func.func @transform_6(%arg0: i32) -> (i32, i32) {
    %c0_i32 = arith.constant 0 : i32
    %c0_i32_0 = arith.constant 0 : i32
    %c0_i32_1 = arith.constant 0 : i32
    return %c0_i32, %c0_i32_0 : i32, i32
  }
  func.func @transform_7(%arg0: i32) -> (i32, i32) {
    %c0_i32 = arith.constant 0 : i32
    %c0_i32_0 = arith.constant 0 : i32
    %c0_i32_1 = arith.constant 0 : i32
    return %c0_i32, %c0_i32_0 : i32, i32
  }
  func.func @transform_8(%arg0: i32) -> (i32, i32) {
    %c0_i32 = arith.constant 0 : i32
    %c0_i32_0 = arith.constant 0 : i32
    %c0_i32_1 = arith.constant 0 : i32
    return %c0_i32, %c0_i32_0 : i32, i32
  }
}

</mosaic_0001>

<llo_original>
// kernel: simple_lstm_forward.1
$region0: #{simple_lstm_forward.1}
  #allocation0 [shape = 'u32[]', space=smem, size = 0x4, offset = 0x4, fixed_abs, tag = 'smem constant byte address 0x4 - core index']
  #allocation1 [shape = 'u32[144,128]{1,0:T(1,128)}', space=vmem, size = 0x12000, scoped, tag = 'internal scratch']
  #allocation2 [shape = 'f32[64,128]{1,0:T(8,128)}', space=vmem, size = 0x8000, scoped, tag = 'scratch operand']
  %s0 = inlined_call_operand.vmem [shape: f32[64,16], index: 0, kind: input, shape index: {}]
  %s1 = inlined_call_operand.vmem [shape: f32[16,128], index: 1, kind: input, shape index: {}]
  %s2 = inlined_call_operand.vmem [shape: f32[1,128], index: 2, kind: input, shape index: {}]
  %s3 = inlined_call_operand.vmem [shape: f32[1,32,128], index: 3, kind: input, shape index: {}]
  %s4 = inlined_call_operand.vmem [shape: f32[1,1,128], index: 4, kind: input, shape index: {}]
  %s5 = inlined_call_operand.vmem [shape: f32[2,32,128], index: 5, kind: input, shape index: {}]
  %s6 = inlined_call_operand.vmem [shape: f32[32,8], index: 6, kind: input, shape index: {}]
  %s7 = inlined_call_operand.vmem [shape: f32[1,8], index: 7, kind: input, shape index: {}]
  %s8 = inlined_call_operand.vmem [shape: f32[8,8], index: 8, kind: output, shape index: {}]
  %s9 = sld [smem:[#allocation0]]
  $region42: #{simple_lstm_forward.1} parent=0
    _
  %s11 = ssub.s32 1, %s9
  %s12 = scalar_select 0, %s11, %s9
  // Predicated region
  $region2: #{simple_lstm_forward.1} parent=0 // pred_check
    _
  $region3: #{simple_lstm_forward.1} parent=0 // pred_check_branch
    %14 = sbr.rel (0) target = $region5
  $region4: #{simple_lstm_forward.1} parent=0 // pred_region
    _
  $region5: #{simple_lstm_forward.1} parent=0 // pred_fallthru
    _
  // Predicated region
  $region6: #{simple_lstm_forward.1} parent=0 // pred_check
    _
  $region7: #{simple_lstm_forward.1} parent=0 // pred_check_branch
    %16 = sbr.rel (0) target = $region9
  $region8: #{simple_lstm_forward.1} parent=0 // pred_region
    _
  $region9: #{simple_lstm_forward.1} parent=0 // pred_fallthru
    _
  // Predicated region
  $region10: #{simple_lstm_forward.1} parent=0 // pred_check
    _
  $region11: #{simple_lstm_forward.1} parent=0 // pred_check_branch
    %18 = sbr.rel (0) target = $region13
  $region12: #{simple_lstm_forward.1} parent=0 // pred_region
    _
  $region13: #{simple_lstm_forward.1} parent=0 // pred_fallthru
    _
  // Predicated region
  $region14: #{simple_lstm_forward.1} parent=0 // pred_check
    _
  $region15: #{simple_lstm_forward.1} parent=0 // pred_check_branch
    %20 = sbr.rel (0) target = $region17
  $region16: #{simple_lstm_forward.1} parent=0 // pred_region
    _
  $region17: #{simple_lstm_forward.1} parent=0 // pred_fallthru
    _
  // Predicated region
  $region18: #{simple_lstm_forward.1} parent=0 // pred_check
    _
  $region19: #{simple_lstm_forward.1} parent=0 // pred_check_branch
    %22 = sbr.rel (0) target = $region21
  $region20: #{simple_lstm_forward.1} parent=0 // pred_region
    _
  $region21: #{simple_lstm_forward.1} parent=0 // pred_fallthru
    _
  // Predicated region
  $region22: #{simple_lstm_forward.1} parent=0 // pred_check
    _
  $region23: #{simple_lstm_forward.1} parent=0 // pred_check_branch
    %24 = sbr.rel (0) target = $region25
  $region24: #{simple_lstm_forward.1} parent=0 // pred_region
    _
  $region25: #{simple_lstm_forward.1} parent=0 // pred_fallthru
    _
  // Predicated region
  $region26: #{simple_lstm_forward.1} parent=0 // pred_check
    _
  $region27: #{simple_lstm_forward.1} parent=0 // pred_check_branch
    %26 = sbr.rel (0) target = $region29
  $region28: #{simple_lstm_forward.1} parent=0 // pred_region
    _
  $region29: #{simple_lstm_forward.1} parent=0 // pred_fallthru
    _
  // Predicated region
  $region30: #{simple_lstm_forward.1} parent=0 // pred_check
    _
  $region31: #{simple_lstm_forward.1} parent=0 // pred_check_branch
    %28 = sbr.rel (0) target = $region33
  $region32: #{simple_lstm_forward.1} parent=0 // pred_region
    _
  $region33: #{simple_lstm_forward.1} parent=0 // pred_fallthru
    _
  %v29 = vld [vmem:[%s0] sm:$0xff]
  %v30 = vld [vmem:[%s0 + $0x8] sm:$0xff]
  %v31 = vld [vmem:[%s0 + $0x10] sm:$0xff]
  %v32 = vld [vmem:[%s0 + $0x18] sm:$0xff]
  %v33 = vld [vmem:[%s0 + $0x20] sm:$0xff]
  %v34 = vld [vmem:[%s0 + $0x28] sm:$0xff]
  %v35 = vld [vmem:[%s0 + $0x30] sm:$0xff]
  %v36 = vld [vmem:[%s0 + $0x38] sm:$0xff]
  %v37 = vld [vmem:[%s1] sm:$0xff]
  %v38 = vld [vmem:[%s1 + $0x8] sm:$0xff]
  %v39 = vld [vmem:[%s2] sm:$0x1]
  %v41 = vlaneseq
  %v42 = vshrl.u32 %v41, 7
  %v43 = vsub.s32 0, %v42
  %v44 = vrot.slane %v39, %v43
  %vm46 = vcmask 130048
  %v48 = vsel %vm46, %v29, 0
  %v51 = vsel %vm46, %v30, 0
  %v54 = vsel %vm46, %v31, 0
  %v57 = vsel %vm46, %v32, 0
  %v60 = vsel %vm46, %v33, 0
  %v63 = vsel %vm46, %v34, 0
  %v66 = vsel %vm46, %v35, 0
  %v69 = vsel %vm46, %v36, 0
  %71 = vmatprep.subr.mxu0 0.0
  %72 = vmatpush1.msra.mxu0 %v37
  %73 = vmatprep.subr.mxu0 0.0
  %74 = vmatpush1.msra.mxu0 %v38
  %75 = vmatprep.subr.mxu0 0.0
  %76 = vmatpush1.msra.mxu0 0.0
  %77 = vmatprep.subr.mxu0 0.0
  %78 = vmatpush1.msra.mxu0 0.0
  %79 = vmatprep.subr.mxu0 0.0
  %80 = vmatpush1.msra.mxu0 0.0
  %81 = vmatprep.subr.mxu0 0.0
  %82 = vmatpush1.msra.mxu0 0.0
  %83 = vmatprep.subr.mxu0 0.0
  %84 = vmatpush1.msra.mxu0 0.0
  %85 = vmatprep.subr.mxu0 0.0
  %86 = vmatpush1.msra.mxu0 0.0
  %87 = vmatprep.subr.mxu0 0.0
  %88 = vmatpush1.msra.mxu0 0.0
  %89 = vmatprep.subr.mxu0 0.0
  %90 = vmatpush1.msra.mxu0 0.0
  %91 = vmatprep.subr.mxu0 0.0
  %92 = vmatpush1.msra.mxu0 0.0
  %93 = vmatprep.subr.mxu0 0.0
  %94 = vmatpush1.msra.mxu0 0.0
  %95 = vmatprep.subr.mxu0 0.0
  %96 = vmatpush1.msra.mxu0 0.0
  %97 = vmatprep.subr.mxu0 0.0
  %98 = vmatpush1.msra.mxu0 0.0
  %99 = vmatprep.subr.mxu0 0.0
  %100 = vmatpush1.msra.mxu0 0.0
  %101 = vmatprep.subr.mxu0 0.0
  %102 = vmatpush1.msra.mxu0 0.0
  %103 = vmatprep.subr.mxu0 0.0
  %104 = vmatpush1.msra.mxu0 0.0
  %105 = vmatprep.subr.mxu0 0.0
  %106 = vmatpush1.msra.mxu0 0.0
  %107 = vmatprep.subr.mxu0 0.0
  %108 = vmatpush1.msra.mxu0 0.0
  %109 = vmatprep.subr.mxu0 0.0
  %110 = vmatpush1.msra.mxu0 0.0
  %111 = vmatprep.subr.mxu0 0.0
  %112 = vmatpush1.msra.mxu0 0.0
  %113 = vmatprep.subr.mxu0 0.0
  %114 = vmatpush1.msra.mxu0 0.0
  %115 = vmatprep.subr.mxu0 0.0
  %116 = vmatpush1.msra.mxu0 0.0
  %117 = vmatprep.subr.mxu0 0.0
  %118 = vmatpush1.msra.mxu0 0.0
  %119 = vmatprep.subr.mxu0 0.0
  %120 = vmatpush1.msra.mxu0 0.0
  %121 = vmatprep.subr.mxu0 0.0
  %122 = vmatpush1.msra.mxu0 0.0
  %123 = vmatprep.subr.mxu0 0.0
  %124 = vmatpush1.msra.mxu0 0.0
  %125 = vmatprep.subr.mxu0 0.0
  %126 = vmatpush1.msra.mxu0 0.0
  %127 = vmatprep.subr.mxu0 0.0
  %128 = vmatpush1.msra.mxu0 0.0
  %129 = vmatprep.subr.mxu0 0.0
  %130 = vmatpush1.msra.mxu0 0.0
  %131 = vmatprep.subr.mxu0 0.0
  %132 = vmatpush1.msra.mxu0 0.0
  %133 = vmatprep.subr.mxu0 0.0
  %134 = vmatpush1.msra.mxu0 0.0
  %135 = vmatprep.mubr.f32.mxu0 0.0
  %136 = vmatmul.mubr.f32.gmra.mrb[0].mxu0 %v48
  %v137 = vpop.f32.mrb[0].mxu0
  %v138 = vadd.f32 %v44, %v137
  %v139 = vpop.f32.mrb[0].mxu0
  %140 = vmatprep.mubr.f32.mxu0 0.0
  %141 = vmatmul.mubr.f32.gmra.mrb[0].mxu0 %v51
  %v142 = vpop.f32.mrb[0].mxu0
  %v143 = vadd.f32 %v44, %v142
  %v144 = vpop.f32.mrb[0].mxu0
  %145 = vmatprep.mubr.f32.mxu0 0.0
  %146 = vmatmul.mubr.f32.gmra.mrb[0].mxu0 %v54
  %v147 = vpop.f32.mrb[0].mxu0
  %v148 = vadd.f32 %v44, %v147
  %v149 = vpop.f32.mrb[0].mxu0
  %150 = vmatprep.mubr.f32.mxu0 0.0
  %151 = vmatmul.mubr.f32.gmra.mrb[0].mxu0 %v57
  %v152 = vpop.f32.mrb[0].mxu0
  %v153 = vadd.f32 %v44, %v152
  %v154 = vpop.f32.mrb[0].mxu0
  %155 = vmatprep.mubr.f32.mxu0 0.0
  %156 = vmatmul.mubr.f32.gmra.mrb[0].mxu0 %v60
  %v157 = vpop.f32.mrb[0].mxu0
  %v158 = vadd.f32 %v44, %v157
  %v159 = vpop.f32.mrb[0].mxu0
  %160 = vmatprep.mubr.f32.mxu0 0.0
  %161 = vmatmul.mubr.f32.gmra.mrb[0].mxu0 %v63
  %v162 = vpop.f32.mrb[0].mxu0
  %v163 = vadd.f32 %v44, %v162
  %v164 = vpop.f32.mrb[0].mxu0
  %165 = vmatprep.mubr.f32.mxu0 0.0
  %166 = vmatmul.mubr.f32.gmra.mrb[0].mxu0 %v66
  %v167 = vpop.f32.mrb[0].mxu0
  %v168 = vadd.f32 %v44, %v167
  %v169 = vpop.f32.mrb[0].mxu0
  %170 = vmatprep.mubr.f32.mxu0 0.0
  %171 = vmatmul.mubr.f32.gmra.mrb[0].mxu0 %v69
  %v172 = vpop.f32.mrb[0].mxu0
  %v173 = vadd.f32 %v44, %v172
  %v174 = vpop.f32.mrb[0].mxu0
  %175 = vdwg.mxu0
  %176 = vst [vmem:[#allocation2] sm:$0xff] %v138
  %177 = vst [vmem:[#allocation2 + $0x8] sm:$0xff] %v143
  %178 = vst [vmem:[#allocation2 + $0x10] sm:$0xff] %v148
  %179 = vst [vmem:[#allocation2 + $0x18] sm:$0xff] %v153
  %180 = vst [vmem:[#allocation2 + $0x20] sm:$0xff] %v158
  %181 = vst [vmem:[#allocation2 + $0x28] sm:$0xff] %v163
  %182 = vst [vmem:[#allocation2 + $0x30] sm:$0xff] %v168
  %183 = vst [vmem:[#allocation2 + $0x38] sm:$0xff] %v173
  %v184 = vld [vmem:[%s5] sm:$0xff]
  %v185 = vld [vmem:[%s5 + $0x8] sm:$0xff]
  %v186 = vld [vmem:[%s5 + $0x10] sm:$0xff]
  %v187 = vld [vmem:[%s5 + $0x18] sm:$0xff]
  %v188 = vld [vmem:[#allocation2] sm:$0xff]
  %vm189 = vcmask 261120
  %v191 = vsel %vm189, 0.0, 0
  %193 = vmatprep.subr.mxu0 0.0
  %194 = vmatpush1.msra.mxu0 %v184
  %195 = vmatprep.subr.mxu0 0.0
  %196 = vmatpush1.msra.mxu0 %v185
  %197 = vmatprep.subr.mxu0 0.0
  %198 = vmatpush1.msra.mxu0 %v186
  %199 = vmatprep.subr.mxu0 0.0
  %200 = vmatpush1.msra.mxu0 %v187
  %201 = vmatprep.subr.mxu0 0.0
  %202 = vmatpush1.msra.mxu0 0.0
  %203 = vmatprep.subr.mxu0 0.0
  %204 = vmatpush1.msra.mxu0 0.0
  %205 = vmatprep.subr.mxu0 0.0
  %206 = vmatpush1.msra.mxu0 0.0
  %207 = vmatprep.subr.mxu0 0.0
  %208 = vmatpush1.msra.mxu0 0.0
  %209 = vmatprep.subr.mxu0 0.0
  %210 = vmatpush1.msra.mxu0 0.0
  %211 = vmatprep.subr.mxu0 0.0
  %212 = vmatpush1.msra.mxu0 0.0
  %213 = vmatprep.subr.mxu0 0.0
  %214 = vmatpush1.msra.mxu0 0.0
  %215 = vmatprep.subr.mxu0 0.0
  %216 = vmatpush1.msra.mxu0 0.0
  %217 = vmatprep.subr.mxu0 0.0
  %218 = vmatpush1.msra.mxu0 0.0
  %219 = vmatprep.subr.mxu0 0.0
  %220 = vmatpush1.msra.mxu0 0.0
  %221 = vmatprep.subr.mxu0 0.0
  %222 = vmatpush1.msra.mxu0 0.0
  %223 = vmatprep.subr.mxu0 0.0
  %224 = vmatpush1.msra.mxu0 0.0
  %225 = vmatprep.subr.mxu0 0.0
  %226 = vmatpush1.msra.mxu0 0.0
  %227 = vmatprep.subr.mxu0 0.0
  %228 = vmatpush1.msra.mxu0 0.0
  %229 = vmatprep.subr.mxu0 0.0
  %230 = vmatpush1.msra.mxu0 0.0
  %231 = vmatprep.subr.mxu0 0.0
  %232 = vmatpush1.msra.mxu0 0.0
  %233 = vmatprep.subr.mxu0 0.0
  %234 = vmatpush1.msra.mxu0 0.0
  %235 = vmatprep.subr.mxu0 0.0
  %236 = vmatpush1.msra.mxu0 0.0
  %237 = vmatprep.subr.mxu0 0.0
  %238 = vmatpush1.msra.mxu0 0.0
  %239 = vmatprep.subr.mxu0 0.0
  %240 = vmatpush1.msra.mxu0 0.0
  %241 = vmatprep.subr.mxu0 0.0
  %242 = vmatpush1.msra.mxu0 0.0
  %243 = vmatprep.subr.mxu0 0.0
  %244 = vmatpush1.msra.mxu0 0.0
  %245 = vmatprep.subr.mxu0 0.0
  %246 = vmatpush1.msra.mxu0 0.0
  %247 = vmatprep.subr.mxu0 0.0
  %248 = vmatpush1.msra.mxu0 0.0
  %249 = vmatprep.subr.mxu0 0.0
  %250 = vmatpush1.msra.mxu0 0.0
  %251 = vmatprep.subr.mxu0 0.0
  %252 = vmatpush1.msra.mxu0 0.0
  %253 = vmatprep.subr.mxu0 0.0
  %254 = vmatpush1.msra.mxu0 0.0
  %255 = vmatprep.subr.mxu0 0.0
  %256 = vmatpush1.msra.mxu0 0.0
  %257 = vmatprep.mubr.f32.mxu0 0.0
  %258 = vmatmul.mubr.f32.gmra.mrb[0].mxu0 %v191
  %v259 = vpop.f32.mrb[0].mxu0
  %v260 = vadd.f32 0.0, %v259
  %v261 = vpop.f32.mrb[0].mxu0
  %262 = vdwg.mxu0
  %v263 = vadd.f32 %v188, %v260
  %v264 = vxor.u32 %v263, 2147483648
  %v265 = vmul.f32 %v264, 1.442695
  %v266 = vpow.pop %v265
  %v267 = vadd.f32 %v266, 1.0
  %v268 = vrcp.pop %v267
  %v269 = vmul.f32 1.0, %v268
  %v270 = vtanh.pop %v263
  %v271 = vmul.f32 %v269, 0.0
  %273 = vrot.lane.b32.xlu0 %v270, 32
  %v274 = vpop.permute.xlu0 %273
  %v276 = vmul.f32 %v269, %v274
  %278 = vrot.lane.b32.xlu0 %v276, 32
  %v279 = vpop.permute.xlu0 %278
  %v281 = vadd.f32 %v271, %v279
  %v282 = vtanh.pop %v281
  %284 = vrot.lane.b32.xlu0 %v282, 32
  %v285 = vpop.permute.xlu0 %284
  %v287 = vmul.f32 %v269, %v285
  %v288 = vld [vmem:[#allocation2 + $0x8] sm:$0xff]
  %290 = vrot.lane.b32.xlu0 %v287, 64
  %v291 = vpop.permute.xlu0 %290
  %v292 = vsel %vm189, %v291, 0
  %294 = vmatprep.subr.mxu0 0.0
  %295 = vmatpush1.msra.mxu0 %v184
  %296 = vmatprep.subr.mxu0 0.0
  %297 = vmatpush1.msra.mxu0 %v185
  %298 = vmatprep.subr.mxu0 0.0
  %299 = vmatpush1.msra.mxu0 %v186
  %300 = vmatprep.subr.mxu0 0.0
  %301 = vmatpush1.msra.mxu0 %v187
  %302 = vmatprep.subr.mxu0 0.0
  %303 = vmatpush1.msra.mxu0 0.0
  %304 = vmatprep.subr.mxu0 0.0
  %305 = vmatpush1.msra.mxu0 0.0
  %306 = vmatprep.subr.mxu0 0.0
  %307 = vmatpush1.msra.mxu0 0.0
  %308 = vmatprep.subr.mxu0 0.0
  %309 = vmatpush1.msra.mxu0 0.0
  %310 = vmatprep.subr.mxu0 0.0
  %311 = vmatpush1.msra.mxu0 0.0
  %312 = vmatprep.subr.mxu0 0.0
  %313 = vmatpush1.msra.mxu0 0.0
  %314 = vmatprep.subr.mxu0 0.0
  %315 = vmatpush1.msra.mxu0 0.0
  %316 = vmatprep.subr.mxu0 0.0
  %317 = vmatpush1.msra.mxu0 0.0
  %318 = vmatprep.subr.mxu0 0.0
  %319 = vmatpush1.msra.mxu0 0.0
  %320 = vmatprep.subr.mxu0 0.0
  %321 = vmatpush1.msra.mxu0 0.0
  %322 = vmatprep.subr.mxu0 0.0
  %323 = vmatpush1.msra.mxu0 0.0
  %324 = vmatprep.subr.mxu0 0.0
  %325 = vmatpush1.msra.mxu0 0.0
  %326 = vmatprep.subr.mxu0 0.0
  %327 = vmatpush1.msra.mxu0 0.0
  %328 = vmatprep.subr.mxu0 0.0
  %329 = vmatpush1.msra.mxu0 0.0
  %330 = vmatprep.subr.mxu0 0.0
  %331 = vmatpush1.msra.mxu0 0.0
  %332 = vmatprep.subr.mxu0 0.0
  %333 = vmatpush1.msra.mxu0 0.0
  %334 = vmatprep.subr.mxu0 0.0
  %335 = vmatpush1.msra.mxu0 0.0
  %336 = vmatprep.subr.mxu0 0.0
  %337 = vmatpush1.msra.mxu0 0.0
  %338 = vmatprep.subr.mxu0 0.0
  %339 = vmatpush1.msra.mxu0 0.0
  %340 = vmatprep.subr.mxu0 0.0
  %341 = vmatpush1.msra.mxu0 0.0
  %342 = vmatprep.subr.mxu0 0.0
  %343 = vmatpush1.msra.mxu0 0.0
  %344 = vmatprep.subr.mxu0 0.0
  %345 = vmatpush1.msra.mxu0 0.0
  %346 = vmatprep.subr.mxu0 0.0
  %347 = vmatpush1.msra.mxu0 0.0
  %348 = vmatprep.subr.mxu0 0.0
  %349 = vmatpush1.msra.mxu0 0.0
  %350 = vmatprep.subr.mxu0 0.0
  %351 = vmatpush1.msra.mxu0 0.0
  %352 = vmatprep.subr.mxu0 0.0
  %353 = vmatpush1.msra.mxu0 0.0
  %354 = vmatprep.subr.mxu0 0.0
  %355 = vmatpush1.msra.mxu0 0.0
  %356 = vmatprep.subr.mxu0 0.0
  %357 = vmatpush1.msra.mxu0 0.0
  %358 = vmatprep.mubr.f32.mxu0 0.0
  %359 = vmatmul.mubr.f32.gmra.mrb[0].mxu0 %v292
  %v360 = vpop.f32.mrb[0].mxu0
  %v361 = vadd.f32 0.0, %v360
  %v362 = vpop.f32.mrb[0].mxu0
  %363 = vdwg.mxu0
  %v364 = vadd.f32 %v288, %v361
  %v365 = vxor.u32 %v364, 2147483648
  %v366 = vmul.f32 %v365, 1.442695
  %v367 = vpow.pop %v366
  %v368 = vadd.f32 %v367, 1.0
  %v369 = vrcp.pop %v368
  %v370 = vmul.f32 1.0, %v369
  %v371 = vtanh.pop %v364
  %v372 = vmul.f32 %v370, %v281
  %374 = vrot.lane.b32.xlu0 %v371, 32
  %v375 = vpop.permute.xlu0 %374
  %v377 = vmul.f32 %v370, %v375
  %379 = vrot.lane.b32.xlu0 %v377, 32
  %v380 = vpop.permute.xlu0 %379
  %v382 = vadd.f32 %v372, %v380
  %v383 = vtanh.pop %v382
  %385 = vrot.lane.b32.xlu0 %v383, 32
  %v386 = vpop.permute.xlu0 %385
  %v388 = vmul.f32 %v370, %v386
  %v389 = vld [vmem:[#allocation2 + $0x10] sm:$0xff]
  %391 = vrot.lane.b32.xlu0 %v388, 64
  %v392 = vpop.permute.xlu0 %391
  %v393 = vsel %vm189, %v392, 0
  %395 = vmatprep.subr.mxu0 0.0
  %396 = vmatpush1.msra.mxu0 %v184
  %397 = vmatprep.subr.mxu0 0.0
  %398 = vmatpush1.msra.mxu0 %v185
  %399 = vmatprep.subr.mxu0 0.0
  %400 = vmatpush1.msra.mxu0 %v186
  %401 = vmatprep.subr.mxu0 0.0
  %402 = vmatpush1.msra.mxu0 %v187
  %403 = vmatprep.subr.mxu0 0.0
  %404 = vmatpush1.msra.mxu0 0.0
  %405 = vmatprep.subr.mxu0 0.0
  %406 = vmatpush1.msra.mxu0 0.0
  %407 = vmatprep.subr.mxu0 0.0
  %408 = vmatpush1.msra.mxu0 0.0
  %409 = vmatprep.subr.mxu0 0.0
  %410 = vmatpush1.msra.mxu0 0.0
  %411 = vmatprep.subr.mxu0 0.0
  %412 = vmatpush1.msra.mxu0 0.0
  %413 = vmatprep.subr.mxu0 0.0
  %414 = vmatpush1.msra.mxu0 0.0
  %415 = vmatprep.subr.mxu0 0.0
  %416 = vmatpush1.msra.mxu0 0.0
  %417 = vmatprep.subr.mxu0 0.0
  %418 = vmatpush1.msra.mxu0 0.0
  %419 = vmatprep.subr.mxu0 0.0
  %420 = vmatpush1.msra.mxu0 0.0
  %421 = vmatprep.subr.mxu0 0.0
  %422 = vmatpush1.msra.mxu0 0.0
  %423 = vmatprep.subr.mxu0 0.0
  %424 = vmatpush1.msra.mxu0 0.0
  %425 = vmatprep.subr.mxu0 0.0
  %426 = vmatpush1.msra.mxu0 0.0
  %427 = vmatprep.subr.mxu0 0.0
  %428 = vmatpush1.msra.mxu0 0.0
  %429 = vmatprep.subr.mxu0 0.0
  %430 = vmatpush1.msra.mxu0 0.0
  %431 = vmatprep.subr.mxu0 0.0
  %432 = vmatpush1.msra.mxu0 0.0
  %433 = vmatprep.subr.mxu0 0.0
  %434 = vmatpush1.msra.mxu0 0.0
  %435 = vmatprep.subr.mxu0 0.0
  %436 = vmatpush1.msra.mxu0 0.0
  %437 = vmatprep.subr.mxu0 0.0
  %438 = vmatpush1.msra.mxu0 0.0
  %439 = vmatprep.subr.mxu0 0.0
  %440 = vmatpush1.msra.mxu0 0.0
  %441 = vmatprep.subr.mxu0 0.0
  %442 = vmatpush1.msra.mxu0 0.0
  %443 = vmatprep.subr.mxu0 0.0
  %444 = vmatpush1.msra.mxu0 0.0
  %445 = vmatprep.subr.mxu0 0.0
  %446 = vmatpush1.msra.mxu0 0.0
  %447 = vmatprep.subr.mxu0 0.0
  %448 = vmatpush1.msra.mxu0 0.0
  %449 = vmatprep.subr.mxu0 0.0
  %450 = vmatpush1.msra.mxu0 0.0
  %451 = vmatprep.subr.mxu0 0.0
  %452 = vmatpush1.msra.mxu0 0.0
  %453 = vmatprep.subr.mxu0 0.0
  %454 = vmatpush1.msra.mxu0 0.0
  %455 = vmatprep.subr.mxu0 0.0
  %456 = vmatpush1.msra.mxu0 0.0
  %457 = vmatprep.subr.mxu0 0.0
  %458 = vmatpush1.msra.mxu0 0.0
  %459 = vmatprep.mubr.f32.mxu0 0.0
  %460 = vmatmul.mubr.f32.gmra.mrb[0].mxu0 %v393
  %v461 = vpop.f32.mrb[0].mxu0
  %v462 = vadd.f32 0.0, %v461
  %v463 = vpop.f32.mrb[0].mxu0
  %464 = vdwg.mxu0
  %v465 = vadd.f32 %v389, %v462
  %v466 = vxor.u32 %v465, 2147483648
  %v467 = vmul.f32 %v466, 1.442695
  %v468 = vpow.pop %v467
  %v469 = vadd.f32 %v468, 1.0
  %v470 = vrcp.pop %v469
  %v471 = vmul.f32 1.0, %v470
  %v472 = vtanh.pop %v465
  %v473 = vmul.f32 %v471, %v382
  %475 = vrot.lane.b32.xlu0 %v472, 32
  %v476 = vpop.permute.xlu0 %475
  %v478 = vmul.f32 %v471, %v476
  %480 = vrot.lane.b32.xlu0 %v478, 32
  %v481 = vpop.permute.xlu0 %480
  %v483 = vadd.f32 %v473, %v481
  %v484 = vtanh.pop %v483
  %486 = vrot.lane.b32.xlu0 %v484, 32
  %v487 = vpop.permute.xlu0 %486
  %v489 = vmul.f32 %v471, %v487
  %v490 = vld [vmem:[#allocation2 + $0x18] sm:$0xff]
  %492 = vrot.lane.b32.xlu0 %v489, 64
  %v493 = vpop.permute.xlu0 %492
  %v494 = vsel %vm189, %v493, 0
  %496 = vmatprep.subr.mxu0 0.0
  %497 = vmatpush1.msra.mxu0 %v184
  %498 = vmatprep.subr.mxu0 0.0
  %499 = vmatpush1.msra.mxu0 %v185
  %500 = vmatprep.subr.mxu0 0.0
  %501 = vmatpush1.msra.mxu0 %v186
  %502 = vmatprep.subr.mxu0 0.0
  %503 = vmatpush1.msra.mxu0 %v187
  %504 = vmatprep.subr.mxu0 0.0
  %505 = vmatpush1.msra.mxu0 0.0
  %506 = vmatprep.subr.mxu0 0.0
  %507 = vmatpush1.msra.mxu0 0.0
  %508 = vmatprep.subr.mxu0 0.0
  %509 = vmatpush1.msra.mxu0 0.0
  %510 = vmatprep.subr.mxu0 0.0
  %511 = vmatpush1.msra.mxu0 0.0
  %512 = vmatprep.subr.mxu0 0.0
  %513 = vmatpush1.msra.mxu0 0.0
  %514 = vmatprep.subr.mxu0 0.0
  %515 = vmatpush1.msra.mxu0 0.0
  %516 = vmatprep.subr.mxu0 0.0
  %517 = vmatpush1.msra.mxu0 0.0
  %518 = vmatprep.subr.mxu0 0.0
  %519 = vmatpush1.msra.mxu0 0.0
  %520 = vmatprep.subr.mxu0 0.0
  %521 = vmatpush1.msra.mxu0 0.0
  %522 = vmatprep.subr.mxu0 0.0
  %523 = vmatpush1.msra.mxu0 0.0
  %524 = vmatprep.subr.mxu0 0.0
  %525 = vmatpush1.msra.mxu0 0.0
  %526 = vmatprep.subr.mxu0 0.0
  %527 = vmatpush1.msra.mxu0 0.0
  %528 = vmatprep.subr.mxu0 0.0
  %529 = vmatpush1.msra.mxu0 0.0
  %530 = vmatprep.subr.mxu0 0.0
  %531 = vmatpush1.msra.mxu0 0.0
  %532 = vmatprep.subr.mxu0 0.0
  %533 = vmatpush1.msra.mxu0 0.0
  %534 = vmatprep.subr.mxu0 0.0
  %535 = vmatpush1.msra.mxu0 0.0
  %536 = vmatprep.subr.mxu0 0.0
  %537 = vmatpush1.msra.mxu0 0.0
  %538 = vmatprep.subr.mxu0 0.0
  %539 = vmatpush1.msra.mxu0 0.0
  %540 = vmatprep.subr.mxu0 0.0
  %541 = vmatpush1.msra.mxu0 0.0
  %542 = vmatprep.subr.mxu0 0.0
  %543 = vmatpush1.msra.mxu0 0.0
  %544 = vmatprep.subr.mxu0 0.0
  %545 = vmatpush1.msra.mxu0 0.0
  %546 = vmatprep.subr.mxu0 0.0
  %547 = vmatpush1.msra.mxu0 0.0
  %548 = vmatprep.subr.mxu0 0.0
  %549 = vmatpush1.msra.mxu0 0.0
  %550 = vmatprep.subr.mxu0 0.0
  %551 = vmatpush1.msra.mxu0 0.0
  %552 = vmatprep.subr.mxu0 0.0
  %553 = vmatpush1.msra.mxu0 0.0
  %554 = vmatprep.subr.mxu0 0.0
  %555 = vmatpush1.msra.mxu0 0.0
  %556 = vmatprep.subr.mxu0 0.0
  %557 = vmatpush1.msra.mxu0 0.0
  %558 = vmatprep.subr.mxu0 0.0
  %559 = vmatpush1.msra.mxu0 0.0
  %560 = vmatprep.mubr.f32.mxu0 0.0
  %561 = vmatmul.mubr.f32.gmra.mrb[0].mxu0 %v494
  %v562 = vpop.f32.mrb[0].mxu0
  %v563 = vadd.f32 0.0, %v562
  %v564 = vpop.f32.mrb[0].mxu0
  %565 = vdwg.mxu0
  %v566 = vadd.f32 %v490, %v563
  %v567 = vxor.u32 %v566, 2147483648
  %v568 = vmul.f32 %v567, 1.442695
  %v569 = vpow.pop %v568
  %v570 = vadd.f32 %v569, 1.0
  %v571 = vrcp.pop %v570
  %v572 = vmul.f32 1.0, %v571
  %v573 = vtanh.pop %v566
  %v574 = vmul.f32 %v572, %v483
  %576 = vrot.lane.b32.xlu0 %v573, 32
  %v577 = vpop.permute.xlu0 %576
  %v579 = vmul.f32 %v572, %v577
  %581 = vrot.lane.b32.xlu0 %v579, 32
  %v582 = vpop.permute.xlu0 %581
  %v584 = vadd.f32 %v574, %v582
  %v585 = vtanh.pop %v584
  %587 = vrot.lane.b32.xlu0 %v585, 32
  %v588 = vpop.permute.xlu0 %587
  %v590 = vmul.f32 %v572, %v588
  %v591 = vld [vmem:[#allocation2 + $0x20] sm:$0xff]
  %593 = vrot.lane.b32.xlu0 %v590, 64
  %v594 = vpop.permute.xlu0 %593
  %v595 = vsel %vm189, %v594, 0
  %597 = vmatprep.subr.mxu0 0.0
  %598 = vmatpush1.msra.mxu0 %v184
  %599 = vmatprep.subr.mxu0 0.0
  %600 = vmatpush1.msra.mxu0 %v185
  %601 = vmatprep.subr.mxu0 0.0
  %602 = vmatpush1.msra.mxu0 %v186
  %603 = vmatprep.subr.mxu0 0.0
  %604 = vmatpush1.msra.mxu0 %v187
  %605 = vmatprep.subr.mxu0 0.0
  %606 = vmatpush1.msra.mxu0 0.0
  %607 = vmatprep.subr.mxu0 0.0
  %608 = vmatpush1.msra.mxu0 0.0
  %609 = vmatprep.subr.mxu0 0.0
  %610 = vmatpush1.msra.mxu0 0.0
  %611 = vmatprep.subr.mxu0 0.0
  %612 = vmatpush1.msra.mxu0 0.0
  %613 = vmatprep.subr.mxu0 0.0
  %614 = vmatpush1.msra.mxu0 0.0
  %615 = vmatprep.subr.mxu0 0.0
  %616 = vmatpush1.msra.mxu0 0.0
  %617 = vmatprep.subr.mxu0 0.0
  %618 = vmatpush1.msra.mxu0 0.0
  %619 = vmatprep.subr.mxu0 0.0
  %620 = vmatpush1.msra.mxu0 0.0
  %621 = vmatprep.subr.mxu0 0.0
  %622 = vmatpush1.msra.mxu0 0.0
  %623 = vmatprep.subr.mxu0 0.0
  %624 = vmatpush1.msra.mxu0 0.0
  %625 = vmatprep.subr.mxu0 0.0
  %626 = vmatpush1.msra.mxu0 0.0
  %627 = vmatprep.subr.mxu0 0.0
  %628 = vmatpush1.msra.mxu0 0.0
  %629 = vmatprep.subr.mxu0 0.0
  %630 = vmatpush1.msra.mxu0 0.0
  %631 = vmatprep.subr.mxu0 0.0
  %632 = vmatpush1.msra.mxu0 0.0
  %633 = vmatprep.subr.mxu0 0.0
  %634 = vmatpush1.msra.mxu0 0.0
  %635 = vmatprep.subr.mxu0 0.0
  %636 = vmatpush1.msra.mxu0 0.0
  %637 = vmatprep.subr.mxu0 0.0
  %638 = vmatpush1.msra.mxu0 0.0
  %639 = vmatprep.subr.mxu0 0.0
  %640 = vmatpush1.msra.mxu0 0.0
  %641 = vmatprep.subr.mxu0 0.0
  %642 = vmatpush1.msra.mxu0 0.0
  %643 = vmatprep.subr.mxu0 0.0
  %644 = vmatpush1.msra.mxu0 0.0
  %645 = vmatprep.subr.mxu0 0.0
  %646 = vmatpush1.msra.mxu0 0.0
  %647 = vmatprep.subr.mxu0 0.0
  %648 = vmatpush1.msra.mxu0 0.0
  %649 = vmatprep.subr.mxu0 0.0
  %650 = vmatpush1.msra.mxu0 0.0
  %651 = vmatprep.subr.mxu0 0.0
  %652 = vmatpush1.msra.mxu0 0.0
  %653 = vmatprep.subr.mxu0 0.0
  %654 = vmatpush1.msra.mxu0 0.0
  %655 = vmatprep.subr.mxu0 0.0
  %656 = vmatpush1.msra.mxu0 0.0
  %657 = vmatprep.subr.mxu0 0.0
  %658 = vmatpush1.msra.mxu0 0.0
  %659 = vmatprep.subr.mxu0 0.0
  %660 = vmatpush1.msra.mxu0 0.0
  %661 = vmatprep.mubr.f32.mxu0 0.0
  %662 = vmatmul.mubr.f32.gmra.mrb[0].mxu0 %v595
  %v663 = vpop.f32.mrb[0].mxu0
  %v664 = vadd.f32 0.0, %v663
  %v665 = vpop.f32.mrb[0].mxu0
  %666 = vdwg.mxu0
  %v667 = vadd.f32 %v591, %v664
  %v668 = vxor.u32 %v667, 2147483648
  %v669 = vmul.f32 %v668, 1.442695
  %v670 = vpow.pop %v669
  %v671 = vadd.f32 %v670, 1.0
  %v672 = vrcp.pop %v671
  %v673 = vmul.f32 1.0, %v672
  %v674 = vtanh.pop %v667
  %v675 = vmul.f32 %v673, %v584
  %677 = vrot.lane.b32.xlu0 %v674, 32
  %v678 = vpop.permute.xlu0 %677
  %v680 = vmul.f32 %v673, %v678
  %682 = vrot.lane.b32.xlu0 %v680, 32
  %v683 = vpop.permute.xlu0 %682
  %v685 = vadd.f32 %v675, %v683
  %v686 = vtanh.pop %v685
  %688 = vrot.lane.b32.xlu0 %v686, 32
  %v689 = vpop.permute.xlu0 %688
  %v691 = vmul.f32 %v673, %v689
  %v692 = vld [vmem:[#allocation2 + $0x28] sm:$0xff]
  %694 = vrot.lane.b32.xlu0 %v691, 64
  %v695 = vpop.permute.xlu0 %694
  %v696 = vsel %vm189, %v695, 0
  %698 = vmatprep.subr.mxu0 0.0
  %699 = vmatpush1.msra.mxu0 %v184
  %700 = vmatprep.subr.mxu0 0.0
  %701 = vmatpush1.msra.mxu0 %v185
  %702 = vmatprep.subr.mxu0 0.0
  %703 = vmatpush1.msra.mxu0 %v186
  %704 = vmatprep.subr.mxu0 0.0
  %705 = vmatpush1.msra.mxu0 %v187
  %706 = vmatprep.subr.mxu0 0.0
  %707 = vmatpush1.msra.mxu0 0.0
  %708 = vmatprep.subr.mxu0 0.0
  %709 = vmatpush1.msra.mxu0 0.0
  %710 = vmatprep.subr.mxu0 0.0
  %711 = vmatpush1.msra.mxu0 0.0
  %712 = vmatprep.subr.mxu0 0.0
  %713 = vmatpush1.msra.mxu0 0.0
  %714 = vmatprep.subr.mxu0 0.0
  %715 = vmatpush1.msra.mxu0 0.0
  %716 = vmatprep.subr.mxu0 0.0
  %717 = vmatpush1.msra.mxu0 0.0
  %718 = vmatprep.subr.mxu0 0.0
  %719 = vmatpush1.msra.mxu0 0.0
  %720 = vmatprep.subr.mxu0 0.0
  %721 = vmatpush1.msra.mxu0 0.0
  %722 = vmatprep.subr.mxu0 0.0
  %723 = vmatpush1.msra.mxu0 0.0
  %724 = vmatprep.subr.mxu0 0.0
  %725 = vmatpush1.msra.mxu0 0.0
  %726 = vmatprep.subr.mxu0 0.0
  %727 = vmatpush1.msra.mxu0 0.0
  %728 = vmatprep.subr.mxu0 0.0
  %729 = vmatpush1.msra.mxu0 0.0
  %730 = vmatprep.subr.mxu0 0.0
  %731 = vmatpush1.msra.mxu0 0.0
  %732 = vmatprep.subr.mxu0 0.0
  %733 = vmatpush1.msra.mxu0 0.0
  %734 = vmatprep.subr.mxu0 0.0
  %735 = vmatpush1.msra.mxu0 0.0
  %736 = vmatprep.subr.mxu0 0.0
  %737 = vmatpush1.msra.mxu0 0.0
  %738 = vmatprep.subr.mxu0 0.0
  %739 = vmatpush1.msra.mxu0 0.0
  %740 = vmatprep.subr.mxu0 0.0
  %741 = vmatpush1.msra.mxu0 0.0
  %742 = vmatprep.subr.mxu0 0.0
  %743 = vmatpush1.msra.mxu0 0.0
  %744 = vmatprep.subr.mxu0 0.0
  %745 = vmatpush1.msra.mxu0 0.0
  %746 = vmatprep.subr.mxu0 0.0
  %747 = vmatpush1.msra.mxu0 0.0
  %748 = vmatprep.subr.mxu0 0.0
  %749 = vmatpush1.msra.mxu0 0.0
  %750 = vmatprep.subr.mxu0 0.0
  %751 = vmatpush1.msra.mxu0 0.0
  %752 = vmatprep.subr.mxu0 0.0
  %753 = vmatpush1.msra.mxu0 0.0
  %754 = vmatprep.subr.mxu0 0.0
  %755 = vmatpush1.msra.mxu0 0.0
  %756 = vmatprep.subr.mxu0 0.0
  %757 = vmatpush1.msra.mxu0 0.0
  %758 = vmatprep.subr.mxu0 0.0
  %759 = vmatpush1.msra.mxu0 0.0
  %760 = vmatprep.subr.mxu0 0.0
  %761 = vmatpush1.msra.mxu0 0.0
  %762 = vmatprep.mubr.f32.mxu0 0.0
  %763 = vmatmul.mubr.f32.gmra.mrb[0].mxu0 %v696
  %v764 = vpop.f32.mrb[0].mxu0
  %v765 = vadd.f32 0.0, %v764
  %v766 = vpop.f32.mrb[0].mxu0
  %767 = vdwg.mxu0
  %v768 = vadd.f32 %v692, %v765
  %v769 = vxor.u32 %v768, 2147483648
  %v770 = vmul.f32 %v769, 1.442695
  %v771 = vpow.pop %v770
  %v772 = vadd.f32 %v771, 1.0
  %v773 = vrcp.pop %v772
  %v774 = vmul.f32 1.0, %v773
  %v775 = vtanh.pop %v768
  %v776 = vmul.f32 %v774, %v685
  %778 = vrot.lane.b32.xlu0 %v775, 32
  %v779 = vpop.permute.xlu0 %778
  %v781 = vmul.f32 %v774, %v779
  %783 = vrot.lane.b32.xlu0 %v781, 32
  %v784 = vpop.permute.xlu0 %783
  %v786 = vadd.f32 %v776, %v784
  %v787 = vtanh.pop %v786
  %789 = vrot.lane.b32.xlu0 %v787, 32
  %v790 = vpop.permute.xlu0 %789
  %v792 = vmul.f32 %v774, %v790
  %v793 = vld [vmem:[#allocation2 + $0x30] sm:$0xff]
  %795 = vrot.lane.b32.xlu0 %v792, 64
  %v796 = vpop.permute.xlu0 %795
  %v797 = vsel %vm189, %v796, 0
  %799 = vmatprep.subr.mxu0 0.0
  %800 = vmatpush1.msra.mxu0 %v184
  %801 = vmatprep.subr.mxu0 0.0
  %802 = vmatpush1.msra.mxu0 %v185
  %803 = vmatprep.subr.mxu0 0.0
  %804 = vmatpush1.msra.mxu0 %v186
  %805 = vmatprep.subr.mxu0 0.0
  %806 = vmatpush1.msra.mxu0 %v187
  %807 = vmatprep.subr.mxu0 0.0
  %808 = vmatpush1.msra.mxu0 0.0
  %809 = vmatprep.subr.mxu0 0.0
  %810 = vmatpush1.msra.mxu0 0.0
  %811 = vmatprep.subr.mxu0 0.0
  %812 = vmatpush1.msra.mxu0 0.0
  %813 = vmatprep.subr.mxu0 0.0
  %814 = vmatpush1.msra.mxu0 0.0
  %815 = vmatprep.subr.mxu0 0.0
  %816 = vmatpush1.msra.mxu0 0.0
  %817 = vmatprep.subr.mxu0 0.0
  %818 = vmatpush1.msra.mxu0 0.0
  %819 = vmatprep.subr.mxu0 0.0
  %820 = vmatpush1.msra.mxu0 0.0
  %821 = vmatprep.subr.mxu0 0.0
  %822 = vmatpush1.msra.mxu0 0.0
  %823 = vmatprep.subr.mxu0 0.0
  %824 = vmatpush1.msra.mxu0 0.0
  %825 = vmatprep.subr.mxu0 0.0
  %826 = vmatpush1.msra.mxu0 0.0
  %827 = vmatprep.subr.mxu0 0.0
  %828 = vmatpush1.msra.mxu0 0.0
  %829 = vmatprep.subr.mxu0 0.0
  %830 = vmatpush1.msra.mxu0 0.0
  %831 = vmatprep.subr.mxu0 0.0
  %832 = vmatpush1.msra.mxu0 0.0
  %833 = vmatprep.subr.mxu0 0.0
  %834 = vmatpush1.msra.mxu0 0.0
  %835 = vmatprep.subr.mxu0 0.0
  %836 = vmatpush1.msra.mxu0 0.0
  %837 = vmatprep.subr.mxu0 0.0
  %838 = vmatpush1.msra.mxu0 0.0
  %839 = vmatprep.subr.mxu0 0.0
  %840 = vmatpush1.msra.mxu0 0.0
  %841 = vmatprep.subr.mxu0 0.0
  %842 = vmatpush1.msra.mxu0 0.0
  %843 = vmatprep.subr.mxu0 0.0
  %844 = vmatpush1.msra.mxu0 0.0
  %845 = vmatprep.subr.mxu0 0.0
  %846 = vmatpush1.msra.mxu0 0.0
  %847 = vmatprep.subr.mxu0 0.0
  %848 = vmatpush1.msra.mxu0 0.0
  %849 = vmatprep.subr.mxu0 0.0
  %850 = vmatpush1.msra.mxu0 0.0
  %851 = vmatprep.subr.mxu0 0.0
  %852 = vmatpush1.msra.mxu0 0.0
  %853 = vmatprep.subr.mxu0 0.0
  %854 = vmatpush1.msra.mxu0 0.0
  %855 = vmatprep.subr.mxu0 0.0
  %856 = vmatpush1.msra.mxu0 0.0
  %857 = vmatprep.subr.mxu0 0.0
  %858 = vmatpush1.msra.mxu0 0.0
  %859 = vmatprep.subr.mxu0 0.0
  %860 = vmatpush1.msra.mxu0 0.0
  %861 = vmatprep.subr.mxu0 0.0
  %862 = vmatpush1.msra.mxu0 0.0
  %863 = vmatprep.mubr.f32.mxu0 0.0
  %864 = vmatmul.mubr.f32.gmra.mrb[0].mxu0 %v797
  %v865 = vpop.f32.mrb[0].mxu0
  %v866 = vadd.f32 0.0, %v865
  %v867 = vpop.f32.mrb[0].mxu0
  %868 = vdwg.mxu0
  %v869 = vadd.f32 %v793, %v866
  %v870 = vxor.u32 %v869, 2147483648
  %v871 = vmul.f32 %v870, 1.442695
  %v872 = vpow.pop %v871
  %v873 = vadd.f32 %v872, 1.0
  %v874 = vrcp.pop %v873
  %v875 = vmul.f32 1.0, %v874
  %v876 = vtanh.pop %v869
  %v877 = vmul.f32 %v875, %v786
  %879 = vrot.lane.b32.xlu0 %v876, 32
  %v880 = vpop.permute.xlu0 %879
  %v882 = vmul.f32 %v875, %v880
  %884 = vrot.lane.b32.xlu0 %v882, 32
  %v885 = vpop.permute.xlu0 %884
  %v887 = vadd.f32 %v877, %v885
  %v888 = vtanh.pop %v887
  %890 = vrot.lane.b32.xlu0 %v888, 32
  %v891 = vpop.permute.xlu0 %890
  %v893 = vmul.f32 %v875, %v891
  %v894 = vld [vmem:[#allocation2 + $0x38] sm:$0xff]
  %896 = vrot.lane.b32.xlu0 %v893, 64
  %v897 = vpop.permute.xlu0 %896
  %v898 = vsel %vm189, %v897, 0
  %900 = vmatprep.subr.mxu0 0.0
  %901 = vmatpush1.msra.mxu0 %v184
  %902 = vmatprep.subr.mxu0 0.0
  %903 = vmatpush1.msra.mxu0 %v185
  %904 = vmatprep.subr.mxu0 0.0
  %905 = vmatpush1.msra.mxu0 %v186
  %906 = vmatprep.subr.mxu0 0.0
  %907 = vmatpush1.msra.mxu0 %v187
  %908 = vmatprep.subr.mxu0 0.0
  %909 = vmatpush1.msra.mxu0 0.0
  %910 = vmatprep.subr.mxu0 0.0
  %911 = vmatpush1.msra.mxu0 0.0
  %912 = vmatprep.subr.mxu0 0.0
  %913 = vmatpush1.msra.mxu0 0.0
  %914 = vmatprep.subr.mxu0 0.0
  %915 = vmatpush1.msra.mxu0 0.0
  %916 = vmatprep.subr.mxu0 0.0
  %917 = vmatpush1.msra.mxu0 0.0
  %918 = vmatprep.subr.mxu0 0.0
  %919 = vmatpush1.msra.mxu0 0.0
  %920 = vmatprep.subr.mxu0 0.0
  %921 = vmatpush1.msra.mxu0 0.0
  %922 = vmatprep.subr.mxu0 0.0
  %923 = vmatpush1.msra.mxu0 0.0
  %924 = vmatprep.subr.mxu0 0.0
  %925 = vmatpush1.msra.mxu0 0.0
  %926 = vmatprep.subr.mxu0 0.0
  %927 = vmatpush1.msra.mxu0 0.0
  %928 = vmatprep.subr.mxu0 0.0
  %929 = vmatpush1.msra.mxu0 0.0
  %930 = vmatprep.subr.mxu0 0.0
  %931 = vmatpush1.msra.mxu0 0.0
  %932 = vmatprep.subr.mxu0 0.0
  %933 = vmatpush1.msra.mxu0 0.0
  %934 = vmatprep.subr.mxu0 0.0
  %935 = vmatpush1.msra.mxu0 0.0
  %936 = vmatprep.subr.mxu0 0.0
  %937 = vmatpush1.msra.mxu0 0.0
  %938 = vmatprep.subr.mxu0 0.0
  %939 = vmatpush1.msra.mxu0 0.0
  %940 = vmatprep.subr.mxu0 0.0
  %941 = vmatpush1.msra.mxu0 0.0
  %942 = vmatprep.subr.mxu0 0.0
  %943 = vmatpush1.msra.mxu0 0.0
  %944 = vmatprep.subr.mxu0 0.0
  %945 = vmatpush1.msra.mxu0 0.0
  %946 = vmatprep.subr.mxu0 0.0
  %947 = vmatpush1.msra.mxu0 0.0
  %948 = vmatprep.subr.mxu0 0.0
  %949 = vmatpush1.msra.mxu0 0.0
  %950 = vmatprep.subr.mxu0 0.0
  %951 = vmatpush1.msra.mxu0 0.0
  %952 = vmatprep.subr.mxu0 0.0
  %953 = vmatpush1.msra.mxu0 0.0
  %954 = vmatprep.subr.mxu0 0.0
  %955 = vmatpush1.msra.mxu0 0.0
  %956 = vmatprep.subr.mxu0 0.0
  %957 = vmatpush1.msra.mxu0 0.0
  %958 = vmatprep.subr.mxu0 0.0
  %959 = vmatpush1.msra.mxu0 0.0
  %960 = vmatprep.subr.mxu0 0.0
  %961 = vmatpush1.msra.mxu0 0.0
  %962 = vmatprep.subr.mxu0 0.0
  %963 = vmatpush1.msra.mxu0 0.0
  %964 = vmatprep.mubr.f32.mxu0 0.0
  %965 = vmatmul.mubr.f32.gmra.mrb[0].mxu0 %v898
  %v966 = vpop.f32.mrb[0].mxu0
  %v967 = vadd.f32 0.0, %v966
  %v968 = vpop.f32.mrb[0].mxu0
  %969 = vdwg.mxu0
  %v970 = vadd.f32 %v894, %v967
  %v971 = vxor.u32 %v970, 2147483648
  %v972 = vmul.f32 %v971, 1.442695
  %v973 = vpow.pop %v972
  %v974 = vadd.f32 %v973, 1.0
  %v975 = vrcp.pop %v974
  %v976 = vmul.f32 1.0, %v975
  %v977 = vtanh.pop %v970
  %v978 = vmul.f32 %v976, %v887
  %980 = vrot.lane.b32.xlu0 %v977, 32
  %v981 = vpop.permute.xlu0 %980
  %v983 = vmul.f32 %v976, %v981
  %985 = vrot.lane.b32.xlu0 %v983, 32
  %v986 = vpop.permute.xlu0 %985
  %v988 = vadd.f32 %v978, %v986
  %v989 = vtanh.pop %v988
  %991 = vrot.lane.b32.xlu0 %v989, 32
  %v992 = vpop.permute.xlu0 %991
  %v994 = vmul.f32 %v976, %v992
  %v995 = vld [vmem:[%s3] sm:$0xff]
  %v996 = vld [vmem:[%s3 + $0x8] sm:$0xff]
  %v997 = vld [vmem:[%s3 + $0x10] sm:$0xff]
  %v998 = vld [vmem:[%s3 + $0x18] sm:$0xff]
  %v999 = vld [vmem:[%s4] sm:$0x1]
  %v1001 = vlaneseq
  %v1002 = vshrl.u32 %v1001, 7
  %v1003 = vsub.s32 0, %v1002
  %v1004 = vrot.slane %v999, %v1003
  %1007 = vrot.lane.b32.xlu0 %v994, 64
  %v1008 = vpop.permute.xlu0 %1007
  %v1009 = vsel %vm189, %v1008, 0
  %1011 = vmatprep.subr.mxu0 0.0
  %1012 = vmatpush1.msra.mxu0 %v995
  %1013 = vmatprep.subr.mxu0 0.0
  %1014 = vmatpush1.msra.mxu0 %v996
  %1015 = vmatprep.subr.mxu0 0.0
  %1016 = vmatpush1.msra.mxu0 %v997
  %1017 = vmatprep.subr.mxu0 0.0
  %1018 = vmatpush1.msra.mxu0 %v998
  %1019 = vmatprep.subr.mxu0 0.0
  %1020 = vmatpush1.msra.mxu0 0.0
  %1021 = vmatprep.subr.mxu0 0.0
  %1022 = vmatpush1.msra.mxu0 0.0
  %1023 = vmatprep.subr.mxu0 0.0
  %1024 = vmatpush1.msra.mxu0 0.0
  %1025 = vmatprep.subr.mxu0 0.0
  %1026 = vmatpush1.msra.mxu0 0.0
  %1027 = vmatprep.subr.mxu0 0.0
  %1028 = vmatpush1.msra.mxu0 0.0
  %1029 = vmatprep.subr.mxu0 0.0
  %1030 = vmatpush1.msra.mxu0 0.0
  %1031 = vmatprep.subr.mxu0 0.0
  %1032 = vmatpush1.msra.mxu0 0.0
  %1033 = vmatprep.subr.mxu0 0.0
  %1034 = vmatpush1.msra.mxu0 0.0
  %1035 = vmatprep.subr.mxu0 0.0
  %1036 = vmatpush1.msra.mxu0 0.0
  %1037 = vmatprep.subr.mxu0 0.0
  %1038 = vmatpush1.msra.mxu0 0.0
  %1039 = vmatprep.subr.mxu0 0.0
  %1040 = vmatpush1.msra.mxu0 0.0
  %1041 = vmatprep.subr.mxu0 0.0
  %1042 = vmatpush1.msra.mxu0 0.0
  %1043 = vmatprep.subr.mxu0 0.0
  %1044 = vmatpush1.msra.mxu0 0.0
  %1045 = vmatprep.subr.mxu0 0.0
  %1046 = vmatpush1.msra.mxu0 0.0
  %1047 = vmatprep.subr.mxu0 0.0
  %1048 = vmatpush1.msra.mxu0 0.0
  %1049 = vmatprep.subr.mxu0 0.0
  %1050 = vmatpush1.msra.mxu0 0.0
  %1051 = vmatprep.subr.mxu0 0.0
  %1052 = vmatpush1.msra.mxu0 0.0
  %1053 = vmatprep.subr.mxu0 0.0
  %1054 = vmatpush1.msra.mxu0 0.0
  %1055 = vmatprep.subr.mxu0 0.0
  %1056 = vmatpush1.msra.mxu0 0.0
  %1057 = vmatprep.subr.mxu0 0.0
  %1058 = vmatpush1.msra.mxu0 0.0
  %1059 = vmatprep.subr.mxu0 0.0
  %1060 = vmatpush1.msra.mxu0 0.0
  %1061 = vmatprep.subr.mxu0 0.0
  %1062 = vmatpush1.msra.mxu0 0.0
  %1063 = vmatprep.subr.mxu0 0.0
  %1064 = vmatpush1.msra.mxu0 0.0
  %1065 = vmatprep.subr.mxu0 0.0
  %1066 = vmatpush1.msra.mxu0 0.0
  %1067 = vmatprep.subr.mxu0 0.0
  %1068 = vmatpush1.msra.mxu0 0.0
  %1069 = vmatprep.subr.mxu0 0.0
  %1070 = vmatpush1.msra.mxu0 0.0
  %1071 = vmatprep.subr.mxu0 0.0
  %1072 = vmatpush1.msra.mxu0 0.0
  %1073 = vmatprep.subr.mxu0 0.0
  %1074 = vmatpush1.msra.mxu0 0.0
  %1075 = vmatprep.mubr.f32.mxu0 0.0
  %1076 = vmatmul.mubr.f32.gmra.mrb[0].mxu0 %v292
  %v1077 = vpop.f32.mrb[0].mxu0
  %v1078 = vadd.f32 %v1004, %v1077
  %v1079 = vpop.f32.mrb[0].mxu0
  %1080 = vmatprep.mubr.f32.mxu0 0.0
  %1081 = vmatmul.mubr.f32.gmra.mrb[0].mxu0 %v393
  %v1082 = vpop.f32.mrb[0].mxu0
  %v1083 = vadd.f32 %v1004, %v1082
  %v1084 = vpop.f32.mrb[0].mxu0
  %1085 = vmatprep.mubr.f32.mxu0 0.0
  %1086 = vmatmul.mubr.f32.gmra.mrb[0].mxu0 %v494
  %v1087 = vpop.f32.mrb[0].mxu0
  %v1088 = vadd.f32 %v1004, %v1087
  %v1089 = vpop.f32.mrb[0].mxu0
  %1090 = vmatprep.mubr.f32.mxu0 0.0
  %1091 = vmatmul.mubr.f32.gmra.mrb[0].mxu0 %v595
  %v1092 = vpop.f32.mrb[0].mxu0
  %v1093 = vadd.f32 %v1004, %v1092
  %v1094 = vpop.f32.mrb[0].mxu0
  %1095 = vmatprep.mubr.f32.mxu0 0.0
  %1096 = vmatmul.mubr.f32.gmra.mrb[0].mxu0 %v696
  %v1097 = vpop.f32.mrb[0].mxu0
  %v1098 = vadd.f32 %v1004, %v1097
  %v1099 = vpop.f32.mrb[0].mxu0
  %1100 = vmatprep.mubr.f32.mxu0 0.0
  %1101 = vmatmul.mubr.f32.gmra.mrb[0].mxu0 %v797
  %v1102 = vpop.f32.mrb[0].mxu0
  %v1103 = vadd.f32 %v1004, %v1102
  %v1104 = vpop.f32.mrb[0].mxu0
  %1105 = vmatprep.mubr.f32.mxu0 0.0
  %1106 = vmatmul.mubr.f32.gmra.mrb[0].mxu0 %v898
  %v1107 = vpop.f32.mrb[0].mxu0
  %v1108 = vadd.f32 %v1004, %v1107
  %v1109 = vpop.f32.mrb[0].mxu0
  %1110 = vmatprep.mubr.f32.mxu0 0.0
  %1111 = vmatmul.mubr.f32.gmra.mrb[0].mxu0 %v1009
  %v1112 = vpop.f32.mrb[0].mxu0
  %v1113 = vadd.f32 %v1004, %v1112
  %v1114 = vpop.f32.mrb[0].mxu0
  %1115 = vdwg.mxu0
  %1116 = vst [vmem:[#allocation2] sm:$0xff] %v1078
  %1117 = vst [vmem:[#allocation2 + $0x8] sm:$0xff] %v1083
  %1118 = vst [vmem:[#allocation2 + $0x10] sm:$0xff] %v1088
  %1119 = vst [vmem:[#allocation2 + $0x18] sm:$0xff] %v1093
  %1120 = vst [vmem:[#allocation2 + $0x20] sm:$0xff] %v1098
  %1121 = vst [vmem:[#allocation2 + $0x28] sm:$0xff] %v1103
  %1122 = vst [vmem:[#allocation2 + $0x30] sm:$0xff] %v1108
  %1123 = vst [vmem:[#allocation2 + $0x38] sm:$0xff] %v1113
  %s1124 = scalar_lea.vmem %s5, 32
  %v1125 = vld [vmem:[%s1124] sm:$0xff]
  %v1126 = vld [vmem:[%s1124 + $0x8] sm:$0xff]
  %v1127 = vld [vmem:[%s1124 + $0x10] sm:$0xff]
  %v1128 = vld [vmem:[%s1124 + $0x18] sm:$0xff]
  %v1129 = vld [vmem:[#allocation2] sm:$0xff]
  %1130 = vmatprep.subr.mxu0 0.0
  %1131 = vmatpush1.msra.mxu0 %v1125
  %1132 = vmatprep.subr.mxu0 0.0
  %1133 = vmatpush1.msra.mxu0 %v1126
  %1134 = vmatprep.subr.mxu0 0.0
  %1135 = vmatpush1.msra.mxu0 %v1127
  %1136 = vmatprep.subr.mxu0 0.0
  %1137 = vmatpush1.msra.mxu0 %v1128
  %1138 = vmatprep.subr.mxu0 0.0
  %1139 = vmatpush1.msra.mxu0 0.0
  %1140 = vmatprep.subr.mxu0 0.0
  %1141 = vmatpush1.msra.mxu0 0.0
  %1142 = vmatprep.subr.mxu0 0.0
  %1143 = vmatpush1.msra.mxu0 0.0
  %1144 = vmatprep.subr.mxu0 0.0
  %1145 = vmatpush1.msra.mxu0 0.0
  %1146 = vmatprep.subr.mxu0 0.0
  %1147 = vmatpush1.msra.mxu0 0.0
  %1148 = vmatprep.subr.mxu0 0.0
  %1149 = vmatpush1.msra.mxu0 0.0
  %1150 = vmatprep.subr.mxu0 0.0
  %1151 = vmatpush1.msra.mxu0 0.0
  %1152 = vmatprep.subr.mxu0 0.0
  %1153 = vmatpush1.msra.mxu0 0.0
  %1154 = vmatprep.subr.mxu0 0.0
  %1155 = vmatpush1.msra.mxu0 0.0
  %1156 = vmatprep.subr.mxu0 0.0
  %1157 = vmatpush1.msra.mxu0 0.0
  %1158 = vmatprep.subr.mxu0 0.0
  %1159 = vmatpush1.msra.mxu0 0.0
  %1160 = vmatprep.subr.mxu0 0.0
  %1161 = vmatpush1.msra.mxu0 0.0
  %1162 = vmatprep.subr.mxu0 0.0
  %1163 = vmatpush1.msra.mxu0 0.0
  %1164 = vmatprep.subr.mxu0 0.0
  %1165 = vmatpush1.msra.mxu0 0.0
  %1166 = vmatprep.subr.mxu0 0.0
  %1167 = vmatpush1.msra.mxu0 0.0
  %1168 = vmatprep.subr.mxu0 0.0
  %1169 = vmatpush1.msra.mxu0 0.0
  %1170 = vmatprep.subr.mxu0 0.0
  %1171 = vmatpush1.msra.mxu0 0.0
  %1172 = vmatprep.subr.mxu0 0.0
  %1173 = vmatpush1.msra.mxu0 0.0
  %1174 = vmatprep.subr.mxu0 0.0
  %1175 = vmatpush1.msra.mxu0 0.0
  %1176 = vmatprep.subr.mxu0 0.0
  %1177 = vmatpush1.msra.mxu0 0.0
  %1178 = vmatprep.subr.mxu0 0.0
  %1179 = vmatpush1.msra.mxu0 0.0
  %1180 = vmatprep.subr.mxu0 0.0
  %1181 = vmatpush1.msra.mxu0 0.0
  %1182 = vmatprep.subr.mxu0 0.0
  %1183 = vmatpush1.msra.mxu0 0.0
  %1184 = vmatprep.subr.mxu0 0.0
  %1185 = vmatpush1.msra.mxu0 0.0
  %1186 = vmatprep.subr.mxu0 0.0
  %1187 = vmatpush1.msra.mxu0 0.0
  %1188 = vmatprep.subr.mxu0 0.0
  %1189 = vmatpush1.msra.mxu0 0.0
  %1190 = vmatprep.subr.mxu0 0.0
  %1191 = vmatpush1.msra.mxu0 0.0
  %1192 = vmatprep.subr.mxu0 0.0
  %1193 = vmatpush1.msra.mxu0 0.0
  %1194 = vmatprep.mubr.f32.mxu0 0.0
  %1195 = vmatmul.mubr.f32.gmra.mrb[0].mxu0 %v191
  %v1196 = vpop.f32.mrb[0].mxu0
  %v1197 = vadd.f32 0.0, %v1196
  %v1198 = vpop.f32.mrb[0].mxu0
  %1199 = vdwg.mxu0
  %v1200 = vadd.f32 %v1129, %v1197
  %v1201 = vxor.u32 %v1200, 2147483648
  %v1202 = vmul.f32 %v1201, 1.442695
  %v1203 = vpow.pop %v1202
  %v1204 = vadd.f32 %v1203, 1.0
  %v1205 = vrcp.pop %v1204
  %v1206 = vmul.f32 1.0, %v1205
  %v1207 = vtanh.pop %v1200
  %v1208 = vmul.f32 %v1206, 0.0
  %1210 = vrot.lane.b32.xlu0 %v1207, 32
  %v1211 = vpop.permute.xlu0 %1210
  %v1213 = vmul.f32 %v1206, %v1211
  %1215 = vrot.lane.b32.xlu0 %v1213, 32
  %v1216 = vpop.permute.xlu0 %1215
  %v1218 = vadd.f32 %v1208, %v1216
  %v1219 = vtanh.pop %v1218
  %1221 = vrot.lane.b32.xlu0 %v1219, 32
  %v1222 = vpop.permute.xlu0 %1221
  %v1224 = vmul.f32 %v1206, %v1222
  %v1225 = vld [vmem:[#allocation2 + $0x8] sm:$0xff]
  %1227 = vrot.lane.b32.xlu0 %v1224, 64
  %v1228 = vpop.permute.xlu0 %1227
  %v1229 = vsel %vm189, %v1228, 0
  %1231 = vmatprep.subr.mxu0 0.0
  %1232 = vmatpush1.msra.mxu0 %v1125
  %1233 = vmatprep.subr.mxu0 0.0
  %1234 = vmatpush1.msra.mxu0 %v1126
  %1235 = vmatprep.subr.mxu0 0.0
  %1236 = vmatpush1.msra.mxu0 %v1127
  %1237 = vmatprep.subr.mxu0 0.0
  %1238 = vmatpush1.msra.mxu0 %v1128
  %1239 = vmatprep.subr.mxu0 0.0
  %1240 = vmatpush1.msra.mxu0 0.0
  %1241 = vmatprep.subr.mxu0 0.0
  %1242 = vmatpush1.msra.mxu0 0.0
  %1243 = vmatprep.subr.mxu0 0.0
  %1244 = vmatpush1.msra.mxu0 0.0
  %1245 = vmatprep.subr.mxu0 0.0
  %1246 = vmatpush1.msra.mxu0 0.0
  %1247 = vmatprep.subr.mxu0 0.0
  %1248 = vmatpush1.msra.mxu0 0.0
  %1249 = vmatprep.subr.mxu0 0.0
  %1250 = vmatpush1.msra.mxu0 0.0
  %1251 = vmatprep.subr.mxu0 0.0
  %1252 = vmatpush1.msra.mxu0 0.0
  %1253 = vmatprep.subr.mxu0 0.0
  %1254 = vmatpush1.msra.mxu0 0.0
  %1255 = vmatprep.subr.mxu0 0.0
  %1256 = vmatpush1.msra.mxu0 0.0
  %1257 = vmatprep.subr.mxu0 0.0
  %1258 = vmatpush1.msra.mxu0 0.0
  %1259 = vmatprep.subr.mxu0 0.0
  %1260 = vmatpush1.msra.mxu0 0.0
  %1261 = vmatprep.subr.mxu0 0.0
  %1262 = vmatpush1.msra.mxu0 0.0
  %1263 = vmatprep.subr.mxu0 0.0
  %1264 = vmatpush1.msra.mxu0 0.0
  %1265 = vmatprep.subr.mxu0 0.0
  %1266 = vmatpush1.msra.mxu0 0.0
  %1267 = vmatprep.subr.mxu0 0.0
  %1268 = vmatpush1.msra.mxu0 0.0
  %1269 = vmatprep.subr.mxu0 0.0
  %1270 = vmatpush1.msra.mxu0 0.0
  %1271 = vmatprep.subr.mxu0 0.0
  %1272 = vmatpush1.msra.mxu0 0.0
  %1273 = vmatprep.subr.mxu0 0.0
  %1274 = vmatpush1.msra.mxu0 0.0
  %1275 = vmatprep.subr.mxu0 0.0
  %1276 = vmatpush1.msra.mxu0 0.0
  %1277 = vmatprep.subr.mxu0 0.0
  %1278 = vmatpush1.msra.mxu0 0.0
  %1279 = vmatprep.subr.mxu0 0.0
  %1280 = vmatpush1.msra.mxu0 0.0
  %1281 = vmatprep.subr.mxu0 0.0
  %1282 = vmatpush1.msra.mxu0 0.0
  %1283 = vmatprep.subr.mxu0 0.0
  %1284 = vmatpush1.msra.mxu0 0.0
  %1285 = vmatprep.subr.mxu0 0.0
  %1286 = vmatpush1.msra.mxu0 0.0
  %1287 = vmatprep.subr.mxu0 0.0
  %1288 = vmatpush1.msra.mxu0 0.0
  %1289 = vmatprep.subr.mxu0 0.0
  %1290 = vmatpush1.msra.mxu0 0.0
  %1291 = vmatprep.subr.mxu0 0.0
  %1292 = vmatpush1.msra.mxu0 0.0
  %1293 = vmatprep.subr.mxu0 0.0
  %1294 = vmatpush1.msra.mxu0 0.0
  %1295 = vmatprep.mubr.f32.mxu0 0.0
  %1296 = vmatmul.mubr.f32.gmra.mrb[0].mxu0 %v1229
  %v1297 = vpop.f32.mrb[0].mxu0
  %v1298 = vadd.f32 0.0, %v1297
  %v1299 = vpop.f32.mrb[0].mxu0
  %1300 = vdwg.mxu0
  %v1301 = vadd.f32 %v1225, %v1298
  %v1302 = vxor.u32 %v1301, 2147483648
  %v1303 = vmul.f32 %v1302, 1.442695
  %v1304 = vpow.pop %v1303
  %v1305 = vadd.f32 %v1304, 1.0
  %v1306 = vrcp.pop %v1305
  %v1307 = vmul.f32 1.0, %v1306
  %v1308 = vtanh.pop %v1301
  %v1309 = vmul.f32 %v1307, %v1218
  %1311 = vrot.lane.b32.xlu0 %v1308, 32
  %v1312 = vpop.permute.xlu0 %1311
  %v1314 = vmul.f32 %v1307, %v1312
  %1316 = vrot.lane.b32.xlu0 %v1314, 32
  %v1317 = vpop.permute.xlu0 %1316
  %v1319 = vadd.f32 %v1309, %v1317
  %v1320 = vtanh.pop %v1319
  %1322 = vrot.lane.b32.xlu0 %v1320, 32
  %v1323 = vpop.permute.xlu0 %1322
  %v1325 = vmul.f32 %v1307, %v1323
  %v1326 = vld [vmem:[#allocation2 + $0x10] sm:$0xff]
  %1328 = vrot.lane.b32.xlu0 %v1325, 64
  %v1329 = vpop.permute.xlu0 %1328
  %v1330 = vsel %vm189, %v1329, 0
  %1332 = vmatprep.subr.mxu0 0.0
  %1333 = vmatpush1.msra.mxu0 %v1125
  %1334 = vmatprep.subr.mxu0 0.0
  %1335 = vmatpush1.msra.mxu0 %v1126
  %1336 = vmatprep.subr.mxu0 0.0
  %1337 = vmatpush1.msra.mxu0 %v1127
  %1338 = vmatprep.subr.mxu0 0.0
  %1339 = vmatpush1.msra.mxu0 %v1128
  %1340 = vmatprep.subr.mxu0 0.0
  %1341 = vmatpush1.msra.mxu0 0.0
  %1342 = vmatprep.subr.mxu0 0.0
  %1343 = vmatpush1.msra.mxu0 0.0
  %1344 = vmatprep.subr.mxu0 0.0
  %1345 = vmatpush1.msra.mxu0 0.0
  %1346 = vmatprep.subr.mxu0 0.0
  %1347 = vmatpush1.msra.mxu0 0.0
  %1348 = vmatprep.subr.mxu0 0.0
  %1349 = vmatpush1.msra.mxu0 0.0
  %1350 = vmatprep.subr.mxu0 0.0
  %1351 = vmatpush1.msra.mxu0 0.0
  %1352 = vmatprep.subr.mxu0 0.0
  %1353 = vmatpush1.msra.mxu0 0.0
  %1354 = vmatprep.subr.mxu0 0.0
  %1355 = vmatpush1.msra.mxu0 0.0
  %1356 = vmatprep.subr.mxu0 0.0
  %1357 = vmatpush1.msra.mxu0 0.0
  %1358 = vmatprep.subr.mxu0 0.0
  %1359 = vmatpush1.msra.mxu0 0.0
  %1360 = vmatprep.subr.mxu0 0.0
  %1361 = vmatpush1.msra.mxu0 0.0
  %1362 = vmatprep.subr.mxu0 0.0
  %1363 = vmatpush1.msra.mxu0 0.0
  %1364 = vmatprep.subr.mxu0 0.0
  %1365 = vmatpush1.msra.mxu0 0.0
  %1366 = vmatprep.subr.mxu0 0.0
  %1367 = vmatpush1.msra.mxu0 0.0
  %1368 = vmatprep.subr.mxu0 0.0
  %1369 = vmatpush1.msra.mxu0 0.0
  %1370 = vmatprep.subr.mxu0 0.0
  %1371 = vmatpush1.msra.mxu0 0.0
  %1372 = vmatprep.subr.mxu0 0.0
  %1373 = vmatpush1.msra.mxu0 0.0
  %1374 = vmatprep.subr.mxu0 0.0
  %1375 = vmatpush1.msra.mxu0 0.0
  %1376 = vmatprep.subr.mxu0 0.0
  %1377 = vmatpush1.msra.mxu0 0.0
  %1378 = vmatprep.subr.mxu0 0.0
  %1379 = vmatpush1.msra.mxu0 0.0
  %1380 = vmatprep.subr.mxu0 0.0
  %1381 = vmatpush1.msra.mxu0 0.0
  %1382 = vmatprep.subr.mxu0 0.0
  %1383 = vmatpush1.msra.mxu0 0.0
  %1384 = vmatprep.subr.mxu0 0.0
  %1385 = vmatpush1.msra.mxu0 0.0
  %1386 = vmatprep.subr.mxu0 0.0
  %1387 = vmatpush1.msra.mxu0 0.0
  %1388 = vmatprep.subr.mxu0 0.0
  %1389 = vmatpush1.msra.mxu0 0.0
  %1390 = vmatprep.subr.mxu0 0.0
  %1391 = vmatpush1.msra.mxu0 0.0
  %1392 = vmatprep.subr.mxu0 0.0
  %1393 = vmatpush1.msra.mxu0 0.0
  %1394 = vmatprep.subr.mxu0 0.0
  %1395 = vmatpush1.msra.mxu0 0.0
  %1396 = vmatprep.mubr.f32.mxu0 0.0
  %1397 = vmatmul.mubr.f32.gmra.mrb[0].mxu0 %v1330
  %v1398 = vpop.f32.mrb[0].mxu0
  %v1399 = vadd.f32 0.0, %v1398
  %v1400 = vpop.f32.mrb[0].mxu0
  %1401 = vdwg.mxu0
  %v1402 = vadd.f32 %v1326, %v1399
  %v1403 = vxor.u32 %v1402, 2147483648
  %v1404 = vmul.f32 %v1403, 1.442695
  %v1405 = vpow.pop %v1404
  %v1406 = vadd.f32 %v1405, 1.0
  %v1407 = vrcp.pop %v1406
  %v1408 = vmul.f32 1.0, %v1407
  %v1409 = vtanh.pop %v1402
  %v1410 = vmul.f32 %v1408, %v1319
  %1412 = vrot.lane.b32.xlu0 %v1409, 32
  %v1413 = vpop.permute.xlu0 %1412
  %v1415 = vmul.f32 %v1408, %v1413
  %1417 = vrot.lane.b32.xlu0 %v1415, 32
  %v1418 = vpop.permute.xlu0 %1417
  %v1420 = vadd.f32 %v1410, %v1418
  %v1421 = vtanh.pop %v1420
  %1423 = vrot.lane.b32.xlu0 %v1421, 32
  %v1424 = vpop.permute.xlu0 %1423
  %v1426 = vmul.f32 %v1408, %v1424
  %v1427 = vld [vmem:[#allocation2 + $0x18] sm:$0xff]
  %1429 = vrot.lane.b32.xlu0 %v1426, 64
  %v1430 = vpop.permute.xlu0 %1429
  %v1431 = vsel %vm189, %v1430, 0
  %1433 = vmatprep.subr.mxu0 0.0
  %1434 = vmatpush1.msra.mxu0 %v1125
  %1435 = vmatprep.subr.mxu0 0.0
  %1436 = vmatpush1.msra.mxu0 %v1126
  %1437 = vmatprep.subr.mxu0 0.0
  %1438 = vmatpush1.msra.mxu0 %v1127
  %1439 = vmatprep.subr.mxu0 0.0
  %1440 = vmatpush1.msra.mxu0 %v1128
  %1441 = vmatprep.subr.mxu0 0.0
  %1442 = vmatpush1.msra.mxu0 0.0
  %1443 = vmatprep.subr.mxu0 0.0
  %1444 = vmatpush1.msra.mxu0 0.0
  %1445 = vmatprep.subr.mxu0 0.0
  %1446 = vmatpush1.msra.mxu0 0.0
  %1447 = vmatprep.subr.mxu0 0.0
  %1448 = vmatpush1.msra.mxu0 0.0
  %1449 = vmatprep.subr.mxu0 0.0
  %1450 = vmatpush1.msra.mxu0 0.0
  %1451 = vmatprep.subr.mxu0 0.0
  %1452 = vmatpush1.msra.mxu0 0.0
  %1453 = vmatprep.subr.mxu0 0.0
  %1454 = vmatpush1.msra.mxu0 0.0
  %1455 = vmatprep.subr.mxu0 0.0
  %1456 = vmatpush1.msra.mxu0 0.0
  %1457 = vmatprep.subr.mxu0 0.0
  %1458 = vmatpush1.msra.mxu0 0.0
  %1459 = vmatprep.subr.mxu0 0.0
  %1460 = vmatpush1.msra.mxu0 0.0
  %1461 = vmatprep.subr.mxu0 0.0
  %1462 = vmatpush1.msra.mxu0 0.0
  %1463 = vmatprep.subr.mxu0 0.0
  %1464 = vmatpush1.msra.mxu0 0.0
  %1465 = vmatprep.subr.mxu0 0.0
  %1466 = vmatpush1.msra.mxu0 0.0
  %1467 = vmatprep.subr.mxu0 0.0
  %1468 = vmatpush1.msra.mxu0 0.0
  %1469 = vmatprep.subr.mxu0 0.0
  %1470 = vmatpush1.msra.mxu0 0.0
  %1471 = vmatprep.subr.mxu0 0.0
  %1472 = vmatpush1.msra.mxu0 0.0
  %1473 = vmatprep.subr.mxu0 0.0
  %1474 = vmatpush1.msra.mxu0 0.0
  %1475 = vmatprep.subr.mxu0 0.0
  %1476 = vmatpush1.msra.mxu0 0.0
  %1477 = vmatprep.subr.mxu0 0.0
  %1478 = vmatpush1.msra.mxu0 0.0
  %1479 = vmatprep.subr.mxu0 0.0
  %1480 = vmatpush1.msra.mxu0 0.0
  %1481 = vmatprep.subr.mxu0 0.0
  %1482 = vmatpush1.msra.mxu0 0.0
  %1483 = vmatprep.subr.mxu0 0.0
  %1484 = vmatpush1.msra.mxu0 0.0
  %1485 = vmatprep.subr.mxu0 0.0
  %1486 = vmatpush1.msra.mxu0 0.0
  %1487 = vmatprep.subr.mxu0 0.0
  %1488 = vmatpush1.msra.mxu0 0.0
  %1489 = vmatprep.subr.mxu0 0.0
  %1490 = vmatpush1.msra.mxu0 0.0
  %1491 = vmatprep.subr.mxu0 0.0
  %1492 = vmatpush1.msra.mxu0 0.0
  %1493 = vmatprep.subr.mxu0 0.0
  %1494 = vmatpush1.msra.mxu0 0.0
  %1495 = vmatprep.subr.mxu0 0.0
  %1496 = vmatpush1.msra.mxu0 0.0
  %1497 = vmatprep.mubr.f32.mxu0 0.0
  %1498 = vmatmul.mubr.f32.gmra.mrb[0].mxu0 %v1431
  %v1499 = vpop.f32.mrb[0].mxu0
  %v1500 = vadd.f32 0.0, %v1499
  %v1501 = vpop.f32.mrb[0].mxu0
  %1502 = vdwg.mxu0
  %v1503 = vadd.f32 %v1427, %v1500
  %v1504 = vxor.u32 %v1503, 2147483648
  %v1505 = vmul.f32 %v1504, 1.442695
  %v1506 = vpow.pop %v1505
  %v1507 = vadd.f32 %v1506, 1.0
  %v1508 = vrcp.pop %v1507
  %v1509 = vmul.f32 1.0, %v1508
  %v1510 = vtanh.pop %v1503
  %v1511 = vmul.f32 %v1509, %v1420
  %1513 = vrot.lane.b32.xlu0 %v1510, 32
  %v1514 = vpop.permute.xlu0 %1513
  %v1516 = vmul.f32 %v1509, %v1514
  %1518 = vrot.lane.b32.xlu0 %v1516, 32
  %v1519 = vpop.permute.xlu0 %1518
  %v1521 = vadd.f32 %v1511, %v1519
  %v1522 = vtanh.pop %v1521
  %1524 = vrot.lane.b32.xlu0 %v1522, 32
  %v1525 = vpop.permute.xlu0 %1524
  %v1527 = vmul.f32 %v1509, %v1525
  %v1528 = vld [vmem:[#allocation2 + $0x20] sm:$0xff]
  %1530 = vrot.lane.b32.xlu0 %v1527, 64
  %v1531 = vpop.permute.xlu0 %1530
  %v1532 = vsel %vm189, %v1531, 0
  %1534 = vmatprep.subr.mxu0 0.0
  %1535 = vmatpush1.msra.mxu0 %v1125
  %1536 = vmatprep.subr.mxu0 0.0
  %1537 = vmatpush1.msra.mxu0 %v1126
  %1538 = vmatprep.subr.mxu0 0.0
  %1539 = vmatpush1.msra.mxu0 %v1127
  %1540 = vmatprep.subr.mxu0 0.0
  %1541 = vmatpush1.msra.mxu0 %v1128
  %1542 = vmatprep.subr.mxu0 0.0
  %1543 = vmatpush1.msra.mxu0 0.0
  %1544 = vmatprep.subr.mxu0 0.0
  %1545 = vmatpush1.msra.mxu0 0.0
  %1546 = vmatprep.subr.mxu0 0.0
  %1547 = vmatpush1.msra.mxu0 0.0
  %1548 = vmatprep.subr.mxu0 0.0
  %1549 = vmatpush1.msra.mxu0 0.0
  %1550 = vmatprep.subr.mxu0 0.0
  %1551 = vmatpush1.msra.mxu0 0.0
  %1552 = vmatprep.subr.mxu0 0.0
  %1553 = vmatpush1.msra.mxu0 0.0
  %1554 = vmatprep.subr.mxu0 0.0
  %1555 = vmatpush1.msra.mxu0 0.0
  %1556 = vmatprep.subr.mxu0 0.0
  %1557 = vmatpush1.msra.mxu0 0.0
  %1558 = vmatprep.subr.mxu0 0.0
  %1559 = vmatpush1.msra.mxu0 0.0
  %1560 = vmatprep.subr.mxu0 0.0
  %1561 = vmatpush1.msra.mxu0 0.0
  %1562 = vmatprep.subr.mxu0 0.0
  %1563 = vmatpush1.msra.mxu0 0.0
  %1564 = vmatprep.subr.mxu0 0.0
  %1565 = vmatpush1.msra.mxu0 0.0
  %1566 = vmatprep.subr.mxu0 0.0
  %1567 = vmatpush1.msra.mxu0 0.0
  %1568 = vmatprep.subr.mxu0 0.0
  %1569 = vmatpush1.msra.mxu0 0.0
  %1570 = vmatprep.subr.mxu0 0.0
  %1571 = vmatpush1.msra.mxu0 0.0
  %1572 = vmatprep.subr.mxu0 0.0
  %1573 = vmatpush1.msra.mxu0 0.0
  %1574 = vmatprep.subr.mxu0 0.0
  %1575 = vmatpush1.msra.mxu0 0.0
  %1576 = vmatprep.subr.mxu0 0.0
  %1577 = vmatpush1.msra.mxu0 0.0
  %1578 = vmatprep.subr.mxu0 0.0
  %1579 = vmatpush1.msra.mxu0 0.0
  %1580 = vmatprep.subr.mxu0 0.0
  %1581 = vmatpush1.msra.mxu0 0.0
  %1582 = vmatprep.subr.mxu0 0.0
  %1583 = vmatpush1.msra.mxu0 0.0
  %1584 = vmatprep.subr.mxu0 0.0
  %1585 = vmatpush1.msra.mxu0 0.0
  %1586 = vmatprep.subr.mxu0 0.0
  %1587 = vmatpush1.msra.mxu0 0.0
  %1588 = vmatprep.subr.mxu0 0.0
  %1589 = vmatpush1.msra.mxu0 0.0
  %1590 = vmatprep.subr.mxu0 0.0
  %1591 = vmatpush1.msra.mxu0 0.0
  %1592 = vmatprep.subr.mxu0 0.0
  %1593 = vmatpush1.msra.mxu0 0.0
  %1594 = vmatprep.subr.mxu0 0.0
  %1595 = vmatpush1.msra.mxu0 0.0
  %1596 = vmatprep.subr.mxu0 0.0
  %1597 = vmatpush1.msra.mxu0 0.0
  %1598 = vmatprep.mubr.f32.mxu0 0.0
  %1599 = vmatmul.mubr.f32.gmra.mrb[0].mxu0 %v1532
  %v1600 = vpop.f32.mrb[0].mxu0
  %v1601 = vadd.f32 0.0, %v1600
  %v1602 = vpop.f32.mrb[0].mxu0
  %1603 = vdwg.mxu0
  %v1604 = vadd.f32 %v1528, %v1601
  %v1605 = vxor.u32 %v1604, 2147483648
  %v1606 = vmul.f32 %v1605, 1.442695
  %v1607 = vpow.pop %v1606
  %v1608 = vadd.f32 %v1607, 1.0
  %v1609 = vrcp.pop %v1608
  %v1610 = vmul.f32 1.0, %v1609
  %v1611 = vtanh.pop %v1604
  %v1612 = vmul.f32 %v1610, %v1521
  %1614 = vrot.lane.b32.xlu0 %v1611, 32
  %v1615 = vpop.permute.xlu0 %1614
  %v1617 = vmul.f32 %v1610, %v1615
  %1619 = vrot.lane.b32.xlu0 %v1617, 32
  %v1620 = vpop.permute.xlu0 %1619
  %v1622 = vadd.f32 %v1612, %v1620
  %v1623 = vtanh.pop %v1622
  %1625 = vrot.lane.b32.xlu0 %v1623, 32
  %v1626 = vpop.permute.xlu0 %1625
  %v1628 = vmul.f32 %v1610, %v1626
  %v1629 = vld [vmem:[#allocation2 + $0x28] sm:$0xff]
  %1631 = vrot.lane.b32.xlu0 %v1628, 64
  %v1632 = vpop.permute.xlu0 %1631
  %v1633 = vsel %vm189, %v1632, 0
  %1635 = vmatprep.subr.mxu0 0.0
  %1636 = vmatpush1.msra.mxu0 %v1125
  %1637 = vmatprep.subr.mxu0 0.0
  %1638 = vmatpush1.msra.mxu0 %v1126
  %1639 = vmatprep.subr.mxu0 0.0
  %1640 = vmatpush1.msra.mxu0 %v1127
  %1641 = vmatprep.subr.mxu0 0.0
  %1642 = vmatpush1.msra.mxu0 %v1128
  %1643 = vmatprep.subr.mxu0 0.0
  %1644 = vmatpush1.msra.mxu0 0.0
  %1645 = vmatprep.subr.mxu0 0.0
  %1646 = vmatpush1.msra.mxu0 0.0
  %1647 = vmatprep.subr.mxu0 0.0
  %1648 = vmatpush1.msra.mxu0 0.0
  %1649 = vmatprep.subr.mxu0 0.0
  %1650 = vmatpush1.msra.mxu0 0.0
  %1651 = vmatprep.subr.mxu0 0.0
  %1652 = vmatpush1.msra.mxu0 0.0
  %1653 = vmatprep.subr.mxu0 0.0
  %1654 = vmatpush1.msra.mxu0 0.0
  %1655 = vmatprep.subr.mxu0 0.0
  %1656 = vmatpush1.msra.mxu0 0.0
  %1657 = vmatprep.subr.mxu0 0.0
  %1658 = vmatpush1.msra.mxu0 0.0
  %1659 = vmatprep.subr.mxu0 0.0
  %1660 = vmatpush1.msra.mxu0 0.0
  %1661 = vmatprep.subr.mxu0 0.0
  %1662 = vmatpush1.msra.mxu0 0.0
  %1663 = vmatprep.subr.mxu0 0.0
  %1664 = vmatpush1.msra.mxu0 0.0
  %1665 = vmatprep.subr.mxu0 0.0
  %1666 = vmatpush1.msra.mxu0 0.0
  %1667 = vmatprep.subr.mxu0 0.0
  %1668 = vmatpush1.msra.mxu0 0.0
  %1669 = vmatprep.subr.mxu0 0.0
  %1670 = vmatpush1.msra.mxu0 0.0
  %1671 = vmatprep.subr.mxu0 0.0
  %1672 = vmatpush1.msra.mxu0 0.0
  %1673 = vmatprep.subr.mxu0 0.0
  %1674 = vmatpush1.msra.mxu0 0.0
  %1675 = vmatprep.subr.mxu0 0.0
  %1676 = vmatpush1.msra.mxu0 0.0
  %1677 = vmatprep.subr.mxu0 0.0
  %1678 = vmatpush1.msra.mxu0 0.0
  %1679 = vmatprep.subr.mxu0 0.0
  %1680 = vmatpush1.msra.mxu0 0.0
  %1681 = vmatprep.subr.mxu0 0.0
  %1682 = vmatpush1.msra.mxu0 0.0
  %1683 = vmatprep.subr.mxu0 0.0
  %1684 = vmatpush1.msra.mxu0 0.0
  %1685 = vmatprep.subr.mxu0 0.0
  %1686 = vmatpush1.msra.mxu0 0.0
  %1687 = vmatprep.subr.mxu0 0.0
  %1688 = vmatpush1.msra.mxu0 0.0
  %1689 = vmatprep.subr.mxu0 0.0
  %1690 = vmatpush1.msra.mxu0 0.0
  %1691 = vmatprep.subr.mxu0 0.0
  %1692 = vmatpush1.msra.mxu0 0.0
  %1693 = vmatprep.subr.mxu0 0.0
  %1694 = vmatpush1.msra.mxu0 0.0
  %1695 = vmatprep.subr.mxu0 0.0
  %1696 = vmatpush1.msra.mxu0 0.0
  %1697 = vmatprep.subr.mxu0 0.0
  %1698 = vmatpush1.msra.mxu0 0.0
  %1699 = vmatprep.mubr.f32.mxu0 0.0
  %1700 = vmatmul.mubr.f32.gmra.mrb[0].mxu0 %v1633
  %v1701 = vpop.f32.mrb[0].mxu0
  %v1702 = vadd.f32 0.0, %v1701
  %v1703 = vpop.f32.mrb[0].mxu0
  %1704 = vdwg.mxu0
  %v1705 = vadd.f32 %v1629, %v1702
  %v1706 = vxor.u32 %v1705, 2147483648
  %v1707 = vmul.f32 %v1706, 1.442695
  %v1708 = vpow.pop %v1707
  %v1709 = vadd.f32 %v1708, 1.0
  %v1710 = vrcp.pop %v1709
  %v1711 = vmul.f32 1.0, %v1710
  %v1712 = vtanh.pop %v1705
  %v1713 = vmul.f32 %v1711, %v1622
  %1715 = vrot.lane.b32.xlu0 %v1712, 32
  %v1716 = vpop.permute.xlu0 %1715
  %v1718 = vmul.f32 %v1711, %v1716
  %1720 = vrot.lane.b32.xlu0 %v1718, 32
  %v1721 = vpop.permute.xlu0 %1720
  %v1723 = vadd.f32 %v1713, %v1721
  %v1724 = vtanh.pop %v1723
  %1726 = vrot.lane.b32.xlu0 %v1724, 32
  %v1727 = vpop.permute.xlu0 %1726
  %v1729 = vmul.f32 %v1711, %v1727
  %v1730 = vld [vmem:[#allocation2 + $0x30] sm:$0xff]
  %1732 = vrot.lane.b32.xlu0 %v1729, 64
  %v1733 = vpop.permute.xlu0 %1732
  %v1734 = vsel %vm189, %v1733, 0
  %1736 = vmatprep.subr.mxu0 0.0
  %1737 = vmatpush1.msra.mxu0 %v1125
  %1738 = vmatprep.subr.mxu0 0.0
  %1739 = vmatpush1.msra.mxu0 %v1126
  %1740 = vmatprep.subr.mxu0 0.0
  %1741 = vmatpush1.msra.mxu0 %v1127
  %1742 = vmatprep.subr.mxu0 0.0
  %1743 = vmatpush1.msra.mxu0 %v1128
  %1744 = vmatprep.subr.mxu0 0.0
  %1745 = vmatpush1.msra.mxu0 0.0
  %1746 = vmatprep.subr.mxu0 0.0
  %1747 = vmatpush1.msra.mxu0 0.0
  %1748 = vmatprep.subr.mxu0 0.0
  %1749 = vmatpush1.msra.mxu0 0.0
  %1750 = vmatprep.subr.mxu0 0.0
  %1751 = vmatpush1.msra.mxu0 0.0
  %1752 = vmatprep.subr.mxu0 0.0
  %1753 = vmatpush1.msra.mxu0 0.0
  %1754 = vmatprep.subr.mxu0 0.0
  %1755 = vmatpush1.msra.mxu0 0.0
  %1756 = vmatprep.subr.mxu0 0.0
  %1757 = vmatpush1.msra.mxu0 0.0
  %1758 = vmatprep.subr.mxu0 0.0
  %1759 = vmatpush1.msra.mxu0 0.0
  %1760 = vmatprep.subr.mxu0 0.0
  %1761 = vmatpush1.msra.mxu0 0.0
  %1762 = vmatprep.subr.mxu0 0.0
  %1763 = vmatpush1.msra.mxu0 0.0
  %1764 = vmatprep.subr.mxu0 0.0
  %1765 = vmatpush1.msra.mxu0 0.0
  %1766 = vmatprep.subr.mxu0 0.0
  %1767 = vmatpush1.msra.mxu0 0.0
  %1768 = vmatprep.subr.mxu0 0.0
  %1769 = vmatpush1.msra.mxu0 0.0
  %1770 = vmatprep.subr.mxu0 0.0
  %1771 = vmatpush1.msra.mxu0 0.0
  %1772 = vmatprep.subr.mxu0 0.0
  %1773 = vmatpush1.msra.mxu0 0.0
  %1774 = vmatprep.subr.mxu0 0.0
  %1775 = vmatpush1.msra.mxu0 0.0
  %1776 = vmatprep.subr.mxu0 0.0
  %1777 = vmatpush1.msra.mxu0 0.0
  %1778 = vmatprep.subr.mxu0 0.0
  %1779 = vmatpush1.msra.mxu0 0.0
  %1780 = vmatprep.subr.mxu0 0.0
  %1781 = vmatpush1.msra.mxu0 0.0
  %1782 = vmatprep.subr.mxu0 0.0
  %1783 = vmatpush1.msra.mxu0 0.0
  %1784 = vmatprep.subr.mxu0 0.0
  %1785 = vmatpush1.msra.mxu0 0.0
  %1786 = vmatprep.subr.mxu0 0.0
  %1787 = vmatpush1.msra.mxu0 0.0
  %1788 = vmatprep.subr.mxu0 0.0
  %1789 = vmatpush1.msra.mxu0 0.0
  %1790 = vmatprep.subr.mxu0 0.0
  %1791 = vmatpush1.msra.mxu0 0.0
  %1792 = vmatprep.subr.mxu0 0.0
  %1793 = vmatpush1.msra.mxu0 0.0
  %1794 = vmatprep.subr.mxu0 0.0
  %1795 = vmatpush1.msra.mxu0 0.0
  %1796 = vmatprep.subr.mxu0 0.0
  %1797 = vmatpush1.msra.mxu0 0.0
  %1798 = vmatprep.subr.mxu0 0.0
  %1799 = vmatpush1.msra.mxu0 0.0
  %1800 = vmatprep.mubr.f32.mxu0 0.0
  %1801 = vmatmul.mubr.f32.gmra.mrb[0].mxu0 %v1734
  %v1802 = vpop.f32.mrb[0].mxu0
  %v1803 = vadd.f32 0.0, %v1802
  %v1804 = vpop.f32.mrb[0].mxu0
  %1805 = vdwg.mxu0
  %v1806 = vadd.f32 %v1730, %v1803
  %v1807 = vxor.u32 %v1806, 2147483648
  %v1808 = vmul.f32 %v1807, 1.442695
  %v1809 = vpow.pop %v1808
  %v1810 = vadd.f32 %v1809, 1.0
  %v1811 = vrcp.pop %v1810
  %v1812 = vmul.f32 1.0, %v1811
  %v1813 = vtanh.pop %v1806
  %v1814 = vmul.f32 %v1812, %v1723
  %1816 = vrot.lane.b32.xlu0 %v1813, 32
  %v1817 = vpop.permute.xlu0 %1816
  %v1819 = vmul.f32 %v1812, %v1817
  %1821 = vrot.lane.b32.xlu0 %v1819, 32
  %v1822 = vpop.permute.xlu0 %1821
  %v1824 = vadd.f32 %v1814, %v1822
  %v1825 = vtanh.pop %v1824
  %1827 = vrot.lane.b32.xlu0 %v1825, 32
  %v1828 = vpop.permute.xlu0 %1827
  %v1830 = vmul.f32 %v1812, %v1828
  %v1831 = vld [vmem:[#allocation2 + $0x38] sm:$0xff]
  %1833 = vrot.lane.b32.xlu0 %v1830, 64
  %v1834 = vpop.permute.xlu0 %1833
  %v1835 = vsel %vm189, %v1834, 0
  %1837 = vmatprep.subr.mxu0 0.0
  %1838 = vmatpush1.msra.mxu0 %v1125
  %1839 = vmatprep.subr.mxu0 0.0
  %1840 = vmatpush1.msra.mxu0 %v1126
  %1841 = vmatprep.subr.mxu0 0.0
  %1842 = vmatpush1.msra.mxu0 %v1127
  %1843 = vmatprep.subr.mxu0 0.0
  %1844 = vmatpush1.msra.mxu0 %v1128
  %1845 = vmatprep.subr.mxu0 0.0
  %1846 = vmatpush1.msra.mxu0 0.0
  %1847 = vmatprep.subr.mxu0 0.0
  %1848 = vmatpush1.msra.mxu0 0.0
  %1849 = vmatprep.subr.mxu0 0.0
  %1850 = vmatpush1.msra.mxu0 0.0
  %1851 = vmatprep.subr.mxu0 0.0
  %1852 = vmatpush1.msra.mxu0 0.0
  %1853 = vmatprep.subr.mxu0 0.0
  %1854 = vmatpush1.msra.mxu0 0.0
  %1855 = vmatprep.subr.mxu0 0.0
  %1856 = vmatpush1.msra.mxu0 0.0
  %1857 = vmatprep.subr.mxu0 0.0
  %1858 = vmatpush1.msra.mxu0 0.0
  %1859 = vmatprep.subr.mxu0 0.0
  %1860 = vmatpush1.msra.mxu0 0.0
  %1861 = vmatprep.subr.mxu0 0.0
  %1862 = vmatpush1.msra.mxu0 0.0
  %1863 = vmatprep.subr.mxu0 0.0
  %1864 = vmatpush1.msra.mxu0 0.0
  %1865 = vmatprep.subr.mxu0 0.0
  %1866 = vmatpush1.msra.mxu0 0.0
  %1867 = vmatprep.subr.mxu0 0.0
  %1868 = vmatpush1.msra.mxu0 0.0
  %1869 = vmatprep.subr.mxu0 0.0
  %1870 = vmatpush1.msra.mxu0 0.0
  %1871 = vmatprep.subr.mxu0 0.0
  %1872 = vmatpush1.msra.mxu0 0.0
  %1873 = vmatprep.subr.mxu0 0.0
  %1874 = vmatpush1.msra.mxu0 0.0
  %1875 = vmatprep.subr.mxu0 0.0
  %1876 = vmatpush1.msra.mxu0 0.0
  %1877 = vmatprep.subr.mxu0 0.0
  %1878 = vmatpush1.msra.mxu0 0.0
  %1879 = vmatprep.subr.mxu0 0.0
  %1880 = vmatpush1.msra.mxu0 0.0
  %1881 = vmatprep.subr.mxu0 0.0
  %1882 = vmatpush1.msra.mxu0 0.0
  %1883 = vmatprep.subr.mxu0 0.0
  %1884 = vmatpush1.msra.mxu0 0.0
  %1885 = vmatprep.subr.mxu0 0.0
  %1886 = vmatpush1.msra.mxu0 0.0
  %1887 = vmatprep.subr.mxu0 0.0
  %1888 = vmatpush1.msra.mxu0 0.0
  %1889 = vmatprep.subr.mxu0 0.0
  %1890 = vmatpush1.msra.mxu0 0.0
  %1891 = vmatprep.subr.mxu0 0.0
  %1892 = vmatpush1.msra.mxu0 0.0
  %1893 = vmatprep.subr.mxu0 0.0
  %1894 = vmatpush1.msra.mxu0 0.0
  %1895 = vmatprep.subr.mxu0 0.0
  %1896 = vmatpush1.msra.mxu0 0.0
  %1897 = vmatprep.subr.mxu0 0.0
  %1898 = vmatpush1.msra.mxu0 0.0
  %1899 = vmatprep.subr.mxu0 0.0
  %1900 = vmatpush1.msra.mxu0 0.0
  %1901 = vmatprep.mubr.f32.mxu0 0.0
  %1902 = vmatmul.mubr.f32.gmra.mrb[0].mxu0 %v1835
  %v1903 = vpop.f32.mrb[0].mxu0
  %v1904 = vadd.f32 0.0, %v1903
  %v1905 = vpop.f32.mrb[0].mxu0
  %1906 = vdwg.mxu0
  %v1907 = vadd.f32 %v1831, %v1904
  %v1908 = vxor.u32 %v1907, 2147483648
  %v1909 = vmul.f32 %v1908, 1.442695
  %v1910 = vpow.pop %v1909
  %v1911 = vadd.f32 %v1910, 1.0
  %v1912 = vrcp.pop %v1911
  %v1913 = vmul.f32 1.0, %v1912
  %v1914 = vtanh.pop %v1907
  %v1915 = vmul.f32 %v1913, %v1824
  %1917 = vrot.lane.b32.xlu0 %v1914, 32
  %v1918 = vpop.permute.xlu0 %1917
  %v1920 = vmul.f32 %v1913, %v1918
  %1922 = vrot.lane.b32.xlu0 %v1920, 32
  %v1923 = vpop.permute.xlu0 %1922
  %v1925 = vadd.f32 %v1915, %v1923
  %v1926 = vtanh.pop %v1925
  %1928 = vrot.lane.b32.xlu0 %v1926, 32
  %v1929 = vpop.permute.xlu0 %1928
  %v1931 = vmul.f32 %v1913, %v1929
  %v1932 = vld [vmem:[%s6] sm:$0xff]
  %v1933 = vld [vmem:[%s6 + $0x8] sm:$0xff]
  %v1934 = vld [vmem:[%s6 + $0x10] sm:$0xff]
  %v1935 = vld [vmem:[%s6 + $0x18] sm:$0xff]
  %v1936 = vld [vmem:[%s7] sm:$0x1]
  %v1938 = vlaneseq
  %v1939 = vshrl.u32 %v1938, 7
  %v1940 = vsub.s32 0, %v1939
  %v1941 = vrot.slane %v1936, %v1940
  %1944 = vrot.lane.b32.xlu0 %v1931, 64
  %v1945 = vpop.permute.xlu0 %1944
  %v1946 = vsel %vm189, %v1945, 0
  %1948 = vmatprep.subr.mxu0 0.0
  %1949 = vmatpush1.msra.mxu0 %v1932
  %1950 = vmatprep.subr.mxu0 0.0
  %1951 = vmatpush1.msra.mxu0 %v1933
  %1952 = vmatprep.subr.mxu0 0.0
  %1953 = vmatpush1.msra.mxu0 %v1934
  %1954 = vmatprep.subr.mxu0 0.0
  %1955 = vmatpush1.msra.mxu0 %v1935
  %1956 = vmatprep.subr.mxu0 0.0
  %1957 = vmatpush1.msra.mxu0 0.0
  %1958 = vmatprep.subr.mxu0 0.0
  %1959 = vmatpush1.msra.mxu0 0.0
  %1960 = vmatprep.subr.mxu0 0.0
  %1961 = vmatpush1.msra.mxu0 0.0
  %1962 = vmatprep.subr.mxu0 0.0
  %1963 = vmatpush1.msra.mxu0 0.0
  %1964 = vmatprep.subr.mxu0 0.0
  %1965 = vmatpush1.msra.mxu0 0.0
  %1966 = vmatprep.subr.mxu0 0.0
  %1967 = vmatpush1.msra.mxu0 0.0
  %1968 = vmatprep.subr.mxu0 0.0
  %1969 = vmatpush1.msra.mxu0 0.0
  %1970 = vmatprep.subr.mxu0 0.0
  %1971 = vmatpush1.msra.mxu0 0.0
  %1972 = vmatprep.subr.mxu0 0.0
  %1973 = vmatpush1.msra.mxu0 0.0
  %1974 = vmatprep.subr.mxu0 0.0
  %1975 = vmatpush1.msra.mxu0 0.0
  %1976 = vmatprep.subr.mxu0 0.0
  %1977 = vmatpush1.msra.mxu0 0.0
  %1978 = vmatprep.subr.mxu0 0.0
  %1979 = vmatpush1.msra.mxu0 0.0
  %1980 = vmatprep.subr.mxu0 0.0
  %1981 = vmatpush1.msra.mxu0 0.0
  %1982 = vmatprep.subr.mxu0 0.0
  %1983 = vmatpush1.msra.mxu0 0.0
  %1984 = vmatprep.subr.mxu0 0.0
  %1985 = vmatpush1.msra.mxu0 0.0
  %1986 = vmatprep.subr.mxu0 0.0
  %1987 = vmatpush1.msra.mxu0 0.0
  %1988 = vmatprep.subr.mxu0 0.0
  %1989 = vmatpush1.msra.mxu0 0.0
  %1990 = vmatprep.subr.mxu0 0.0
  %1991 = vmatpush1.msra.mxu0 0.0
  %1992 = vmatprep.subr.mxu0 0.0
  %1993 = vmatpush1.msra.mxu0 0.0
  %1994 = vmatprep.subr.mxu0 0.0
  %1995 = vmatpush1.msra.mxu0 0.0
  %1996 = vmatprep.subr.mxu0 0.0
  %1997 = vmatpush1.msra.mxu0 0.0
  %1998 = vmatprep.subr.mxu0 0.0
  %1999 = vmatpush1.msra.mxu0 0.0
  %2000 = vmatprep.subr.mxu0 0.0
  %2001 = vmatpush1.msra.mxu0 0.0
  %2002 = vmatprep.subr.mxu0 0.0
  %2003 = vmatpush1.msra.mxu0 0.0
  %2004 = vmatprep.subr.mxu0 0.0
  %2005 = vmatpush1.msra.mxu0 0.0
  %2006 = vmatprep.subr.mxu0 0.0
  %2007 = vmatpush1.msra.mxu0 0.0
  %2008 = vmatprep.subr.mxu0 0.0
  %2009 = vmatpush1.msra.mxu0 0.0
  %2010 = vmatprep.subr.mxu0 0.0
  %2011 = vmatpush1.msra.mxu0 0.0
  %2012 = vmatprep.mubr.f32.mxu0 0.0
  %2013 = vmatmul.mubr.f32.gmra.mrb[0].mxu0 %v1946
  %v2014 = vpop.f32.mrb[0].mxu0
  %v2015 = vadd.f32 %v1941, %v2014
  %v2016 = vpop.f32.mrb[0].mxu0
  %2017 = vdwg.mxu0
  %vm2018 = vcmask 64512
  %2019 = vst.msk [vmem:[%s8] sm:$0xff] %vm2018, %v2015
  // Predicated region
  $region34: #{simple_lstm_forward.1} parent=0 // pred_check
    _
  $region35: #{simple_lstm_forward.1} parent=0 // pred_check_branch
    %2021 = sbr.rel (0) target = $region37
  $region36: #{simple_lstm_forward.1} parent=0 // pred_region
    _
  $region37: #{simple_lstm_forward.1} parent=0 // pred_fallthru
    _
  // Predicated region
  $region38: #{simple_lstm_forward.1} parent=0 // pred_check
    _
  $region39: #{simple_lstm_forward.1} parent=0 // pred_check_branch
    %2023 = sbr.rel (0) target = $region41
  $region40: #{simple_lstm_forward.1} parent=0 // pred_region
    _
  $region41: #{simple_lstm_forward.1} parent=0 // pred_fallthru
    _

</llo_original>
